<compile_context>
chip_gen: v6e
topology: v6e:2x2x1
jax: 0.10.0
libtpu: 0.0.40
codegen_flags: <defaults>
</compile_context>

<pallas_src>
import functools

import jax
import jax.numpy as jnp
import numpy as np
from jax import lax
from jax.experimental import pallas as pl
from jax.experimental.pallas import tpu as pltpu

# ----- small, module-consistent config -----
INPUT_DIM = 16
D_MODEL = 32
NHEAD = 4
NUM_LAYERS = 2
DIM_FF = 64
BATCH = 2
SEQ = 8
MAX_POS = 100          # pos_encoder table length in the PyTorch module
LN_EPS = 1e-5

HEAD_DIM = D_MODEL // NHEAD
_NEG_INF = -1e30
LANES = 128


def _mm(a_f32, w_bf16):
    """MXU matmul: activation cast to bf16 once, weight already bf16, f32 acc."""
    return jnp.dot(a_f32.astype(jnp.bfloat16), w_bf16,
                   preferred_element_type=jnp.float32)


def _layernorm(x, g, b):
    mu = jnp.mean(x, axis=-1, keepdims=True)
    xc = x - mu
    var = jnp.mean(xc * xc, axis=-1, keepdims=True)
    return xc * lax.rsqrt(var + LN_EPS) * g + b


# --------------------------------------------------------------------------
# Host-side parameter packing: one bf16 weight slab + one f32 "everything else"
# slab.  Offsets are Python constants closed over by the kernel (static slices).
# --------------------------------------------------------------------------
def _pack_slab(entries, dtype, row_align):
    """entries: [(name, 2-D array)] -> (slab, {name: (row0, shape)})."""
    offsets = {}
    rows = 0
    for name, a in entries:
        a = np.asarray(a, dtype=np.float32)
        offsets[name] = (rows, a.shape)
        rows += ((a.shape[0] + row_align - 1) // row_align) * row_align
    slab = np.zeros((max(rows, row_align), LANES), dtype=np.float32)
    for name, a in entries:
        r0, shape = offsets[name]
        slab[r0:r0 + shape[0], :shape[1]] = np.asarray(a, dtype=np.float32)
    return jnp.asarray(slab, dtype=dtype), offsets


def build_slabs(params, batch, seq):
    bs = batch * seq
    hbs = NHEAD * bs
    scale = 1.0 / np.sqrt(HEAD_DIM)

    # --- bf16 matmul-weight slab (Q columns pre-scaled by 1/sqrt(Dh)) ---
    w_entries = [('emb_w', params['emb_w'])]
    for l, lp in enumerate(params['layers']):
        wqkv = np.asarray(lp['wqkv'], np.float32).copy()
        wqkv[:, :D_MODEL] *= scale
        w_entries += [(f'wqkv{l}', wqkv), (f'wo{l}', lp['wo']),
                      (f'w1{l}', lp['w1']), (f'w2{l}', lp['w2'])]
    w_slab, w_off = _pack_slab(w_entries, jnp.bfloat16, row_align=16)

    # --- f32 slab: pos(+emb bias), (head,batch) block-diag mask, pool matrix,
    #     output head, per-layer biases and LayerNorm params ---
    pos_biased = (np.tile(np.asarray(params['pos_table'][:seq], np.float32), (batch, 1))
                  + np.asarray(params['emb_b'], np.float32))                  # (B*S, D)
    idx = np.arange(hbs)
    head = idx // bs
    bat = (idx % bs) // seq
    same = (head[:, None] == head[None, :]) & (bat[:, None] == bat[None, :])
    attn_bias = np.where(same, 0.0, _NEG_INF).astype(np.float32)              # (H*B*S, H*B*S)
    pool_mat = np.where(np.arange(batch)[:, None] == (np.arange(bs)[None, :] // seq),
                        1.0 / seq, 0.0).astype(np.float32)                    # (B, B*S)

    f_entries = [('pos', pos_biased), ('mask', attn_bias), ('pool', pool_mat),
                 ('out_w', params['out_w']), ('out_b', params['out_b'])]
    for l, lp in enumerate(params['layers']):
        bqkv = np.asarray(lp['bqkv'], np.float32).copy()
        bqkv[:, :D_MODEL] *= scale
        f_entries += [(f'bqkv{l}', bqkv), (f'bo{l}', lp['bo']),
                      (f'g1{l}', lp['g1']), (f'be1{l}', lp['be1']),
                      (f'b1{l}', lp['b1']), (f'b2{l}', lp['b2']),
                      (f'g2{l}', lp['g2']), (f'be2{l}', lp['be2'])]
    f_slab, f_off = _pack_slab(f_entries, jnp.float32, row_align=8)
    return w_slab, w_off, f_slab, f_off


# --------------------------------------------------------------------------
# The fused kernel: embedding + pos-enc + 2 post-norm encoder layers +
# mean pool + output Linear, all on VMEM-resident slabs.
# --------------------------------------------------------------------------
def _make_kernel(w_off, f_off, batch, seq):
    B, S, D, H, Dh = batch, seq, D_MODEL, NHEAD, HEAD_DIM
    BS = B * S
    HBS = H * BS

    def _get(ref, off, name):                     # static slice: zero runtime cost
        r0, shape = off[name]
        return ref[r0:r0 + shape[0], 0:shape[1]]

    def kernel(x_ref, w_ref, f_ref, o_ref):
        gw = lambda n: _get(w_ref, w_off, n)
        gf = lambda n: _get(f_ref, f_off, n)

        # embedding Linear; embedding bias + positional encoding pre-folded.
        y = _mm(x_ref[...], gw('emb_w')) + gf('pos')            # (B*S, D) f32
        mask = gf('mask')                                        # (H*B*S, H*B*S) f32

        for l in range(NUM_LAYERS):                              # post-norm layers
            qkv = _mm(y, gw(f'wqkv{l}')) + gf(f'bqkv{l}')        # (B*S, 3D); Q pre-scaled
            # stack heads onto the sublane axis: (B*S, D) -> (H*B*S, Dh)
            qs = jnp.concatenate([qkv[:, h * Dh:(h + 1) * Dh] for h in range(H)], axis=0)
            ks = jnp.concatenate([qkv[:, D + h * Dh:D + (h + 1) * Dh] for h in range(H)], axis=0)
            vs = jnp.concatenate([qkv[:, 2 * D + h * Dh:2 * D + (h + 1) * Dh] for h in range(H)], axis=0)

            # ONE score matmul / softmax / p@v for all heads & batches; the
            # additive (head,batch) block-diagonal bias masks cross terms.
            s = lax.dot_general(qs.astype(jnp.bfloat16), ks.astype(jnp.bfloat16),
                                (((1,), (1,)), ((), ())),
                                preferred_element_type=jnp.float32)   # (HBS, HBS)
            s = s + mask
            m = jnp.max(s, axis=-1, keepdims=True)    # finite: >= S valid entries per row
            p = jnp.exp(s - m)
            p = p * pl.reciprocal(jnp.sum(p, axis=-1, keepdims=True), approx=True)
            ov = _mm(p, vs)                                           # (HBS, Dh)
            # unstack heads back to the lane axis: (H*B*S, Dh) -> (B*S, D)
            o = jnp.concatenate([ov[h * BS:(h + 1) * BS, :] for h in range(H)], axis=1)

            attn = _mm(o, gw(f'wo{l}')) + gf(f'bo{l}')                # single Wo matmul
            y1 = _layernorm(y + attn, gf(f'g1{l}'), gf(f'be1{l}'))    # add & norm 1
            hdn = jnp.maximum(_mm(y1, gw(f'w1{l}')) + gf(f'b1{l}'), 0.0)
            ff = _mm(hdn, gw(f'w2{l}')) + gf(f'b2{l}')
            y = _layernorm(y1 + ff, gf(f'g2{l}'), gf(f'be2{l}'))      # add & norm 2

        # mean-over-sequence pool + output Linear, kept in f32 (accuracy, free).
        pooled = jnp.dot(gf('pool'), y, preferred_element_type=jnp.float32)   # (B, D)
        o_ref[...] = (jnp.dot(pooled, gf('out_w'), preferred_element_type=jnp.float32)
                      + gf('out_b'))

    return kernel


def attention_to_reward_forward(x, w_slab, w_off, f_slab, f_off):
    """Full forward in a single gridless pallas_call; only (B,1) hits HBM."""
    B, S, Din = x.shape
    BS, HBS = B * S, NHEAD * B * S
    x_flat = x.reshape(BS, Din)                    # contiguous reshape (metadata only)

    flops = 2 * BS * Din * D_MODEL
    flops += NUM_LAYERS * (2 * BS * D_MODEL * 3 * D_MODEL        # qkv
                           + 2 * HBS * HEAD_DIM * HBS            # scores
                           + 2 * HBS * HBS * HEAD_DIM            # p @ v
                           + 2 * BS * D_MODEL * D_MODEL          # Wo
                           + 4 * BS * D_MODEL * DIM_FF)          # FFN
    flops += 2 * B * BS * D_MODEL + 2 * B * D_MODEL              # pool + head
    transcendentals = NUM_LAYERS * (HBS * HBS + HBS) + 4 * NUM_LAYERS * BS
    bytes_accessed = x_flat.size * 4 + w_slab.size * 2 + f_slab.size * 4 + B * 4

    # Gridless: single TC invocation. For large deployed batches, flatten more
    # rows per call (and only then add a "parallel" grid axis for v7x's 2nd TC).
    return pl.pallas_call(
        _make_kernel(w_off, f_off, B, S),
        out_shape=jax.ShapeDtypeStruct((B, 1), jnp.float32),
        cost_estimate=pl.CostEstimate(flops=int(flops),
                                      transcendentals=int(transcendentals),
                                      bytes_accessed=int(bytes_accessed)),
        compiler_params=pltpu.CompilerParams(),
    )(x_flat, w_slab, f_slab)


# --------------------------------------------------------------------------
# Parameter init (deterministic, synthetic)
# --------------------------------------------------------------------------
def init_params(key):
    keys = jax.random.split(key, 5 + NUM_LAYERS)

    def w(k, shape, scale=0.05):
        return scale * jax.random.normal(k, shape, dtype=jnp.float32)

    params = {
        'emb_w': w(keys[0], (INPUT_DIM, D_MODEL)),
        'emb_b': w(keys[1], (1, D_MODEL)),
        'pos_table': w(keys[2], (MAX_POS, D_MODEL)),   # nn.Parameter (1,100,d_model), squeezed
        'out_w': w(keys[3], (D_MODEL, 1)),
        'out_b': w(keys[4], (1, 1)),
        'layers': [],
    }
    for l in range(NUM_LAYERS):
        lk = jax.random.split(keys[5 + l], 8)
        params['layers'].append({
            'wqkv': w(lk[0], (D_MODEL, 3 * D_MODEL)),
            'bqkv': w(lk[1], (1, 3 * D_MODEL)),
            'wo': w(lk[2], (D_MODEL, D_MODEL)),
            'bo': w(lk[3], (1, D_MODEL)),
            'g1': jnp.ones((1, D_MODEL), jnp.float32),
            'be1': jnp.zeros((1, D_MODEL), jnp.float32),
            'w1': w(lk[4], (D_MODEL, DIM_FF)),
            'b1': w(lk[5], (1, DIM_FF)),
            'w2': w(lk[6], (DIM_FF, D_MODEL)),
            'b2': w(lk[7], (1, D_MODEL)),
            'g2': jnp.ones((1, D_MODEL), jnp.float32),
            'be2': jnp.zeros((1, D_MODEL), jnp.float32),
        })
    return params


# --------------------------------------------------------------------------
# Pure-JAX reference (same math, f32 HIGHEST precision) for correctness check
# --------------------------------------------------------------------------
def _ref_layernorm(x, g, b):
    mu = jnp.mean(x, axis=-1, keepdims=True)
    var = jnp.mean((x - mu) ** 2, axis=-1, keepdims=True)
    return (x - mu) * lax.rsqrt(var + LN_EPS) * g + b


def reference_forward(x, params):
    dotp = functools.partial(jnp.dot, precision=lax.Precision.HIGHEST)
    S = x.shape[1]
    y = dotp(x, params['emb_w']) + params['emb_b'] + params['pos_table'][None, :S, :]
    Dh = D_MODEL // NHEAD
    for lp in params['layers']:
        B, S, _ = y.shape
        qkv = dotp(y, lp['wqkv']) + lp['bqkv']
        q, k, v = (qkv[..., :D_MODEL],
                   qkv[..., D_MODEL:2 * D_MODEL],
                   qkv[..., 2 * D_MODEL:])
        qh = q.reshape(B, S, NHEAD, Dh).transpose(0, 2, 1, 3)
        kh = k.reshape(B, S, NHEAD, Dh).transpose(0, 2, 1, 3)
        vh = v.reshape(B, S, NHEAD, Dh).transpose(0, 2, 1, 3)
        s = jnp.einsum('bhqd,bhkd->bhqk', qh, kh,
                       precision=lax.Precision.HIGHEST) / (Dh ** 0.5)
        p = jax.nn.softmax(s, axis=-1)
        o = jnp.einsum('bhqk,bhkd->bhqd', p, vh, precision=lax.Precision.HIGHEST)
        o = o.transpose(0, 2, 1, 3).reshape(B, S, D_MODEL)
        attn = dotp(o, lp['wo']) + lp['bo']
        y1 = _ref_layernorm(y + attn, lp['g1'], lp['be1'])
        h = jax.nn.relu(dotp(y1, lp['w1']) + lp['b1'])
        ff = dotp(h, lp['w2']) + lp['b2']
        y = _ref_layernorm(y1 + ff, lp['g2'], lp['be2'])
    pooled = y.mean(axis=1)
    return dotp(pooled, params['out_w']) + params['out_b']


if __name__ == "__main__":
    key = jax.random.PRNGKey(0)
    pkey, xkey = jax.random.split(key)
    params = init_params(pkey)
    x = jax.random.normal(xkey, (BATCH, SEQ, INPUT_DIM), dtype=jnp.float32)

    w_slab, w_off, f_slab, f_off = build_slabs(params, BATCH, SEQ)
    out = attention_to_reward_forward(x, w_slab, w_off, f_slab, f_off)
    out = jax.block_until_ready(out)

    ref = reference_forward(x, params)
    assert out.shape == (BATCH, 1), out.shape
    if not np.allclose(np.asarray(out), np.asarray(ref), rtol=5e-2, atol=5e-2):
        raise SystemExit(f"MISMATCH\npallas={np.asarray(out)}\nref={np.asarray(ref)}")
    print("KERNEL_OK")
</pallas_src>

<mosaic_0001>
module attributes {stable_mosaic.version = 11 : i64} {
  func.func @kernel(%arg0: memref<16x16xf32, #tpu.memory_space<vmem>>, %arg1: memref<336x128xbf16, #tpu.memory_space<vmem>>, %arg2: memref<256x128xf32, #tpu.memory_space<vmem>>, %arg3: memref<2x1xf32, #tpu.memory_space<vmem>>) attributes {dimension_semantics = [], scalar_prefetch = 0 : i64, scratch_operands = 0 : i64, tpu.core_type = #tpu.core_type<tc>} {
    %c0 = arith.constant 0 : index
    %c0_0 = arith.constant 0 : index
    %0 = vector.load %arg0[%c0, %c0_0] : memref<16x16xf32, #tpu.memory_space<vmem>>, vector<16x16xf32>
    %c0_1 = arith.constant 0 : index
    %c0_2 = arith.constant 0 : index
    %1 = vector.load %arg1[%c0_1, %c0_2] : memref<336x128xbf16, #tpu.memory_space<vmem>>, vector<16x32xbf16>
    %2 = arith.truncf %0 : vector<16x16xf32> to vector<16x16xbf16>
    %cst = arith.constant dense<0.000000e+00> : vector<16x32xf32>
    %3 = tpu.matmul %2, %1, %cst {dimension_numbers = #tpu.dot_dimension_numbers<[1], [0], [0], [1], [0, 0, 1, 1], [], []>} : vector<16x16xbf16>, vector<16x32xbf16>, vector<16x32xf32> -> vector<16x32xf32>
    %c0_3 = arith.constant 0 : index
    %c0_4 = arith.constant 0 : index
    %4 = vector.load %arg2[%c0_3, %c0_4] : memref<256x128xf32, #tpu.memory_space<vmem>>, vector<16x32xf32>
    %5 = arith.addf %3, %4 : vector<16x32xf32>
    %c16 = arith.constant 16 : index
    %c0_5 = arith.constant 0 : index
    %6 = vector.load %arg2[%c16, %c0_5] : memref<256x128xf32, #tpu.memory_space<vmem>>, vector<64x64xf32>
    %c16_6 = arith.constant 16 : index
    %c0_7 = arith.constant 0 : index
    %7 = vector.load %arg1[%c16_6, %c0_7] : memref<336x128xbf16, #tpu.memory_space<vmem>>, vector<32x96xbf16>
    %8 = arith.truncf %5 : vector<16x32xf32> to vector<16x32xbf16>
    %cst_8 = arith.constant dense<0.000000e+00> : vector<16x96xf32>
    %9 = tpu.matmul %8, %7, %cst_8 {dimension_numbers = #tpu.dot_dimension_numbers<[1], [0], [0], [1], [0, 0, 1, 1], [], []>} : vector<16x32xbf16>, vector<32x96xbf16>, vector<16x96xf32> -> vector<16x96xf32>
    %c128 = arith.constant 128 : index
    %c0_9 = arith.constant 0 : index
    %10 = vector.load %arg2[%c128, %c0_9] : memref<256x128xf32, #tpu.memory_space<vmem>>, vector<1x96xf32>
    %11 = vector.broadcast %10 : vector<1x96xf32> to vector<16x96xf32>
    %12 = arith.addf %9, %11 : vector<16x96xf32>
    %13 = vector.extract_strided_slice %12 {offsets = [0, 0], sizes = [16, 8], strides = [1, 1]} : vector<16x96xf32> to vector<16x8xf32>
    %14 = vector.extract_strided_slice %12 {offsets = [0, 8], sizes = [16, 8], strides = [1, 1]} : vector<16x96xf32> to vector<16x8xf32>
    %15 = vector.extract_strided_slice %12 {offsets = [0, 16], sizes = [16, 8], strides = [1, 1]} : vector<16x96xf32> to vector<16x8xf32>
    %16 = vector.extract_strided_slice %12 {offsets = [0, 24], sizes = [16, 8], strides = [1, 1]} : vector<16x96xf32> to vector<16x8xf32>
    %17 = tpu.concatenate %13, %14, %15, %16 in 0 : vector<16x8xf32>, vector<16x8xf32>, vector<16x8xf32>, vector<16x8xf32> -> vector<64x8xf32>
    %18 = vector.extract_strided_slice %12 {offsets = [0, 32], sizes = [16, 8], strides = [1, 1]} : vector<16x96xf32> to vector<16x8xf32>
    %19 = vector.extract_strided_slice %12 {offsets = [0, 40], sizes = [16, 8], strides = [1, 1]} : vector<16x96xf32> to vector<16x8xf32>
    %20 = vector.extract_strided_slice %12 {offsets = [0, 48], sizes = [16, 8], strides = [1, 1]} : vector<16x96xf32> to vector<16x8xf32>
    %21 = vector.extract_strided_slice %12 {offsets = [0, 56], sizes = [16, 8], strides = [1, 1]} : vector<16x96xf32> to vector<16x8xf32>
    %22 = tpu.concatenate %18, %19, %20, %21 in 0 : vector<16x8xf32>, vector<16x8xf32>, vector<16x8xf32>, vector<16x8xf32> -> vector<64x8xf32>
    %23 = vector.extract_strided_slice %12 {offsets = [0, 64], sizes = [16, 8], strides = [1, 1]} : vector<16x96xf32> to vector<16x8xf32>
    %24 = vector.extract_strided_slice %12 {offsets = [0, 72], sizes = [16, 8], strides = [1, 1]} : vector<16x96xf32> to vector<16x8xf32>
    %25 = vector.extract_strided_slice %12 {offsets = [0, 80], sizes = [16, 8], strides = [1, 1]} : vector<16x96xf32> to vector<16x8xf32>
    %26 = vector.extract_strided_slice %12 {offsets = [0, 88], sizes = [16, 8], strides = [1, 1]} : vector<16x96xf32> to vector<16x8xf32>
    %27 = tpu.concatenate %23, %24, %25, %26 in 0 : vector<16x8xf32>, vector<16x8xf32>, vector<16x8xf32>, vector<16x8xf32> -> vector<64x8xf32>
    %28 = arith.truncf %17 : vector<64x8xf32> to vector<64x8xbf16>
    %29 = arith.truncf %22 : vector<64x8xf32> to vector<64x8xbf16>
    %cst_10 = arith.constant dense<0.000000e+00> : vector<64x64xf32>
    %30 = tpu.matmul %28, %29, %cst_10 {dimension_numbers = #tpu.dot_dimension_numbers<[1], [1], [0], [0], [0, 0, 1, 0], [], []>} : vector<64x8xbf16>, vector<64x8xbf16>, vector<64x64xf32> -> vector<64x64xf32>
    %31 = arith.addf %30, %6 : vector<64x64xf32>
    %cst_11 = arith.constant dense<0xFF800000> : vector<64xf32>
    %32 = vector.multi_reduction <maximumf>, %31, %cst_11 [1] : vector<64x64xf32> to vector<64xf32>
    %33 = vector.shape_cast %32 : vector<64xf32> to vector<64x1xf32>
    %34 = vector.broadcast %33 : vector<64x1xf32> to vector<64x64xf32>
    %35 = arith.subf %31, %34 : vector<64x64xf32>
    %36 = math.exp %35 : vector<64x64xf32>
    %cst_12 = arith.constant dense<0.000000e+00> : vector<64xf32>
    %37 = vector.multi_reduction <add>, %36, %cst_12 [1] : vector<64x64xf32> to vector<64xf32>
    %38 = vector.shape_cast %37 : vector<64xf32> to vector<64x1xf32>
    %39 = tpu.reciprocal %38 {approx = true} : vector<64x1xf32> -> vector<64x1xf32>
    %40 = vector.broadcast %39 : vector<64x1xf32> to vector<64x64xf32>
    %41 = arith.mulf %36, %40 : vector<64x64xf32>
    %42 = arith.truncf %41 : vector<64x64xf32> to vector<64x64xbf16>
    %cst_13 = arith.constant dense<0.000000e+00> : vector<64x8xf32>
    %43 = tpu.matmul %42, %27, %cst_13 {dimension_numbers = #tpu.dot_dimension_numbers<[1], [0], [0], [1], [0, 0, 1, 1], [], []>} : vector<64x64xbf16>, vector<64x8xf32>, vector<64x8xf32> -> vector<64x8xf32>
    %44 = vector.extract_strided_slice %43 {offsets = [0, 0], sizes = [16, 8], strides = [1, 1]} : vector<64x8xf32> to vector<16x8xf32>
    %45 = vector.extract_strided_slice %43 {offsets = [16, 0], sizes = [16, 8], strides = [1, 1]} : vector<64x8xf32> to vector<16x8xf32>
    %46 = vector.extract_strided_slice %43 {offsets = [32, 0], sizes = [16, 8], strides = [1, 1]} : vector<64x8xf32> to vector<16x8xf32>
    %47 = vector.extract_strided_slice %43 {offsets = [48, 0], sizes = [16, 8], strides = [1, 1]} : vector<64x8xf32> to vector<16x8xf32>
    %48 = tpu.concatenate %44, %45, %46, %47 in 1 : vector<16x8xf32>, vector<16x8xf32>, vector<16x8xf32>, vector<16x8xf32> -> vector<16x32xf32>
    %c48 = arith.constant 48 : index
    %c0_14 = arith.constant 0 : index
    %49 = vector.load %arg1[%c48, %c0_14] : memref<336x128xbf16, #tpu.memory_space<vmem>>, vector<32x32xbf16>
    %50 = arith.truncf %48 : vector<16x32xf32> to vector<16x32xbf16>
    %cst_15 = arith.constant dense<0.000000e+00> : vector<16x32xf32>
    %51 = tpu.matmul %50, %49, %cst_15 {dimension_numbers = #tpu.dot_dimension_numbers<[1], [0], [0], [1], [0, 0, 1, 1], [], []>} : vector<16x32xbf16>, vector<32x32xbf16>, vector<16x32xf32> -> vector<16x32xf32>
    %c136 = arith.constant 136 : index
    %c0_16 = arith.constant 0 : index
    %52 = vector.load %arg2[%c136, %c0_16] : memref<256x128xf32, #tpu.memory_space<vmem>>, vector<1x32xf32>
    %53 = vector.broadcast %52 : vector<1x32xf32> to vector<16x32xf32>
    %54 = arith.addf %51, %53 : vector<16x32xf32>
    %55 = arith.addf %5, %54 : vector<16x32xf32>
    %c144 = arith.constant 144 : index
    %c0_17 = arith.constant 0 : index
    %56 = vector.load %arg2[%c144, %c0_17] : memref<256x128xf32, #tpu.memory_space<vmem>>, vector<1x32xf32>
    %c152 = arith.constant 152 : index
    %c0_18 = arith.constant 0 : index
    %57 = vector.load %arg2[%c152, %c0_18] : memref<256x128xf32, #tpu.memory_space<vmem>>, vector<1x32xf32>
    %cst_19 = arith.constant dense<0.000000e+00> : vector<16xf32>
    %58 = vector.multi_reduction <add>, %55, %cst_19 [1] : vector<16x32xf32> to vector<16xf32>
    %59 = vector.shape_cast %58 : vector<16xf32> to vector<16x1xf32>
    %cst_20 = arith.constant 3.200000e+01 : f32
    %60 = vector.broadcast %cst_20 : f32 to vector<16x1xf32>
    %61 = arith.divf %59, %60 : vector<16x1xf32>
    %62 = vector.broadcast %61 : vector<16x1xf32> to vector<16x32xf32>
    %63 = arith.subf %55, %62 : vector<16x32xf32>
    %64 = arith.mulf %63, %63 : vector<16x32xf32>
    %cst_21 = arith.constant dense<0.000000e+00> : vector<16xf32>
    %65 = vector.multi_reduction <add>, %64, %cst_21 [1] : vector<16x32xf32> to vector<16xf32>
    %66 = vector.shape_cast %65 : vector<16xf32> to vector<16x1xf32>
    %cst_22 = arith.constant 3.200000e+01 : f32
    %67 = vector.broadcast %cst_22 : f32 to vector<16x1xf32>
    %68 = arith.divf %66, %67 : vector<16x1xf32>
    %cst_23 = arith.constant 9.99999974E-6 : f32
    %69 = vector.broadcast %cst_23 : f32 to vector<16x1xf32>
    %70 = arith.addf %68, %69 : vector<16x1xf32>
    %71 = math.rsqrt %70 : vector<16x1xf32>
    %72 = vector.broadcast %71 : vector<16x1xf32> to vector<16x32xf32>
    %73 = arith.mulf %63, %72 : vector<16x32xf32>
    %74 = vector.broadcast %56 : vector<1x32xf32> to vector<16x32xf32>
    %75 = arith.mulf %73, %74 : vector<16x32xf32>
    %76 = vector.broadcast %57 : vector<1x32xf32> to vector<16x32xf32>
    %77 = arith.addf %75, %76 : vector<16x32xf32>
    %c80 = arith.constant 80 : index
    %c0_24 = arith.constant 0 : index
    %78 = vector.load %arg1[%c80, %c0_24] : memref<336x128xbf16, #tpu.memory_space<vmem>>, vector<32x64xbf16>
    %79 = arith.truncf %77 : vector<16x32xf32> to vector<16x32xbf16>
    %cst_25 = arith.constant dense<0.000000e+00> : vector<16x64xf32>
    %80 = tpu.matmul %79, %78, %cst_25 {dimension_numbers = #tpu.dot_dimension_numbers<[1], [0], [0], [1], [0, 0, 1, 1], [], []>} : vector<16x32xbf16>, vector<32x64xbf16>, vector<16x64xf32> -> vector<16x64xf32>
    %c160 = arith.constant 160 : index
    %c0_26 = arith.constant 0 : index
    %81 = vector.load %arg2[%c160, %c0_26] : memref<256x128xf32, #tpu.memory_space<vmem>>, vector<1x64xf32>
    %82 = vector.broadcast %81 : vector<1x64xf32> to vector<16x64xf32>
    %83 = arith.addf %80, %82 : vector<16x64xf32>
    %cst_27 = arith.constant 0.000000e+00 : f32
    %84 = vector.broadcast %cst_27 : f32 to vector<16x64xf32>
    %85 = arith.maximumf %83, %84 : vector<16x64xf32>
    %c112 = arith.constant 112 : index
    %c0_28 = arith.constant 0 : index
    %86 = vector.load %arg1[%c112, %c0_28] : memref<336x128xbf16, #tpu.memory_space<vmem>>, vector<64x32xbf16>
    %87 = arith.truncf %85 : vector<16x64xf32> to vector<16x64xbf16>
    %cst_29 = arith.constant dense<0.000000e+00> : vector<16x32xf32>
    %88 = tpu.matmul %87, %86, %cst_29 {dimension_numbers = #tpu.dot_dimension_numbers<[1], [0], [0], [1], [0, 0, 1, 1], [], []>} : vector<16x64xbf16>, vector<64x32xbf16>, vector<16x32xf32> -> vector<16x32xf32>
    %c168 = arith.constant 168 : index
    %c0_30 = arith.constant 0 : index
    %89 = vector.load %arg2[%c168, %c0_30] : memref<256x128xf32, #tpu.memory_space<vmem>>, vector<1x32xf32>
    %90 = vector.broadcast %89 : vector<1x32xf32> to vector<16x32xf32>
    %91 = arith.addf %88, %90 : vector<16x32xf32>
    %92 = arith.addf %77, %91 : vector<16x32xf32>
    %c176 = arith.constant 176 : index
    %c0_31 = arith.constant 0 : index
    %93 = vector.load %arg2[%c176, %c0_31] : memref<256x128xf32, #tpu.memory_space<vmem>>, vector<1x32xf32>
    %c184 = arith.constant 184 : index
    %c0_32 = arith.constant 0 : index
    %94 = vector.load %arg2[%c184, %c0_32] : memref<256x128xf32, #tpu.memory_space<vmem>>, vector<1x32xf32>
    %cst_33 = arith.constant dense<0.000000e+00> : vector<16xf32>
    %95 = vector.multi_reduction <add>, %92, %cst_33 [1] : vector<16x32xf32> to vector<16xf32>
    %96 = vector.shape_cast %95 : vector<16xf32> to vector<16x1xf32>
    %cst_34 = arith.constant 3.200000e+01 : f32
    %97 = vector.broadcast %cst_34 : f32 to vector<16x1xf32>
    %98 = arith.divf %96, %97 : vector<16x1xf32>
    %99 = vector.broadcast %98 : vector<16x1xf32> to vector<16x32xf32>
    %100 = arith.subf %92, %99 : vector<16x32xf32>
    %101 = arith.mulf %100, %100 : vector<16x32xf32>
    %cst_35 = arith.constant dense<0.000000e+00> : vector<16xf32>
    %102 = vector.multi_reduction <add>, %101, %cst_35 [1] : vector<16x32xf32> to vector<16xf32>
    %103 = vector.shape_cast %102 : vector<16xf32> to vector<16x1xf32>
    %cst_36 = arith.constant 3.200000e+01 : f32
    %104 = vector.broadcast %cst_36 : f32 to vector<16x1xf32>
    %105 = arith.divf %103, %104 : vector<16x1xf32>
    %cst_37 = arith.constant 9.99999974E-6 : f32
    %106 = vector.broadcast %cst_37 : f32 to vector<16x1xf32>
    %107 = arith.addf %105, %106 : vector<16x1xf32>
    %108 = math.rsqrt %107 : vector<16x1xf32>
    %109 = vector.broadcast %108 : vector<16x1xf32> to vector<16x32xf32>
    %110 = arith.mulf %100, %109 : vector<16x32xf32>
    %111 = vector.broadcast %93 : vector<1x32xf32> to vector<16x32xf32>
    %112 = arith.mulf %110, %111 : vector<16x32xf32>
    %113 = vector.broadcast %94 : vector<1x32xf32> to vector<16x32xf32>
    %114 = arith.addf %112, %113 : vector<16x32xf32>
    %c176_38 = arith.constant 176 : index
    %c0_39 = arith.constant 0 : index
    %115 = vector.load %arg1[%c176_38, %c0_39] : memref<336x128xbf16, #tpu.memory_space<vmem>>, vector<32x96xbf16>
    %116 = arith.truncf %114 : vector<16x32xf32> to vector<16x32xbf16>
    %cst_40 = arith.constant dense<0.000000e+00> : vector<16x96xf32>
    %117 = tpu.matmul %116, %115, %cst_40 {dimension_numbers = #tpu.dot_dimension_numbers<[1], [0], [0], [1], [0, 0, 1, 1], [], []>} : vector<16x32xbf16>, vector<32x96xbf16>, vector<16x96xf32> -> vector<16x96xf32>
    %c192 = arith.constant 192 : index
    %c0_41 = arith.constant 0 : index
    %118 = vector.load %arg2[%c192, %c0_41] : memref<256x128xf32, #tpu.memory_space<vmem>>, vector<1x96xf32>
    %119 = vector.broadcast %118 : vector<1x96xf32> to vector<16x96xf32>
    %120 = arith.addf %117, %119 : vector<16x96xf32>
    %121 = vector.extract_strided_slice %120 {offsets = [0, 0], sizes = [16, 8], strides = [1, 1]} : vector<16x96xf32> to vector<16x8xf32>
    %122 = vector.extract_strided_slice %120 {offsets = [0, 8], sizes = [16, 8], strides = [1, 1]} : vector<16x96xf32> to vector<16x8xf32>
    %123 = vector.extract_strided_slice %120 {offsets = [0, 16], sizes = [16, 8], strides = [1, 1]} : vector<16x96xf32> to vector<16x8xf32>
    %124 = vector.extract_strided_slice %120 {offsets = [0, 24], sizes = [16, 8], strides = [1, 1]} : vector<16x96xf32> to vector<16x8xf32>
    %125 = tpu.concatenate %121, %122, %123, %124 in 0 : vector<16x8xf32>, vector<16x8xf32>, vector<16x8xf32>, vector<16x8xf32> -> vector<64x8xf32>
    %126 = vector.extract_strided_slice %120 {offsets = [0, 32], sizes = [16, 8], strides = [1, 1]} : vector<16x96xf32> to vector<16x8xf32>
    %127 = vector.extract_strided_slice %120 {offsets = [0, 40], sizes = [16, 8], strides = [1, 1]} : vector<16x96xf32> to vector<16x8xf32>
    %128 = vector.extract_strided_slice %120 {offsets = [0, 48], sizes = [16, 8], strides = [1, 1]} : vector<16x96xf32> to vector<16x8xf32>
    %129 = vector.extract_strided_slice %120 {offsets = [0, 56], sizes = [16, 8], strides = [1, 1]} : vector<16x96xf32> to vector<16x8xf32>
    %130 = tpu.concatenate %126, %127, %128, %129 in 0 : vector<16x8xf32>, vector<16x8xf32>, vector<16x8xf32>, vector<16x8xf32> -> vector<64x8xf32>
    %131 = vector.extract_strided_slice %120 {offsets = [0, 64], sizes = [16, 8], strides = [1, 1]} : vector<16x96xf32> to vector<16x8xf32>
    %132 = vector.extract_strided_slice %120 {offsets = [0, 72], sizes = [16, 8], strides = [1, 1]} : vector<16x96xf32> to vector<16x8xf32>
    %133 = vector.extract_strided_slice %120 {offsets = [0, 80], sizes = [16, 8], strides = [1, 1]} : vector<16x96xf32> to vector<16x8xf32>
    %134 = vector.extract_strided_slice %120 {offsets = [0, 88], sizes = [16, 8], strides = [1, 1]} : vector<16x96xf32> to vector<16x8xf32>
    %135 = tpu.concatenate %131, %132, %133, %134 in 0 : vector<16x8xf32>, vector<16x8xf32>, vector<16x8xf32>, vector<16x8xf32> -> vector<64x8xf32>
    %136 = arith.truncf %125 : vector<64x8xf32> to vector<64x8xbf16>
    %137 = arith.truncf %130 : vector<64x8xf32> to vector<64x8xbf16>
    %cst_42 = arith.constant dense<0.000000e+00> : vector<64x64xf32>
    %138 = tpu.matmul %136, %137, %cst_42 {dimension_numbers = #tpu.dot_dimension_numbers<[1], [1], [0], [0], [0, 0, 1, 0], [], []>} : vector<64x8xbf16>, vector<64x8xbf16>, vector<64x64xf32> -> vector<64x64xf32>
    %139 = arith.addf %138, %6 : vector<64x64xf32>
    %cst_43 = arith.constant dense<0xFF800000> : vector<64xf32>
    %140 = vector.multi_reduction <maximumf>, %139, %cst_43 [1] : vector<64x64xf32> to vector<64xf32>
    %141 = vector.shape_cast %140 : vector<64xf32> to vector<64x1xf32>
    %142 = vector.broadcast %141 : vector<64x1xf32> to vector<64x64xf32>
    %143 = arith.subf %139, %142 : vector<64x64xf32>
    %144 = math.exp %143 : vector<64x64xf32>
    %cst_44 = arith.constant dense<0.000000e+00> : vector<64xf32>
    %145 = vector.multi_reduction <add>, %144, %cst_44 [1] : vector<64x64xf32> to vector<64xf32>
    %146 = vector.shape_cast %145 : vector<64xf32> to vector<64x1xf32>
    %147 = tpu.reciprocal %146 {approx = true} : vector<64x1xf32> -> vector<64x1xf32>
    %148 = vector.broadcast %147 : vector<64x1xf32> to vector<64x64xf32>
    %149 = arith.mulf %144, %148 : vector<64x64xf32>
    %150 = arith.truncf %149 : vector<64x64xf32> to vector<64x64xbf16>
    %cst_45 = arith.constant dense<0.000000e+00> : vector<64x8xf32>
    %151 = tpu.matmul %150, %135, %cst_45 {dimension_numbers = #tpu.dot_dimension_numbers<[1], [0], [0], [1], [0, 0, 1, 1], [], []>} : vector<64x64xbf16>, vector<64x8xf32>, vector<64x8xf32> -> vector<64x8xf32>
    %152 = vector.extract_strided_slice %151 {offsets = [0, 0], sizes = [16, 8], strides = [1, 1]} : vector<64x8xf32> to vector<16x8xf32>
    %153 = vector.extract_strided_slice %151 {offsets = [16, 0], sizes = [16, 8], strides = [1, 1]} : vector<64x8xf32> to vector<16x8xf32>
    %154 = vector.extract_strided_slice %151 {offsets = [32, 0], sizes = [16, 8], strides = [1, 1]} : vector<64x8xf32> to vector<16x8xf32>
    %155 = vector.extract_strided_slice %151 {offsets = [48, 0], sizes = [16, 8], strides = [1, 1]} : vector<64x8xf32> to vector<16x8xf32>
    %156 = tpu.concatenate %152, %153, %154, %155 in 1 : vector<16x8xf32>, vector<16x8xf32>, vector<16x8xf32>, vector<16x8xf32> -> vector<16x32xf32>
    %c208 = arith.constant 208 : index
    %c0_46 = arith.constant 0 : index
    %157 = vector.load %arg1[%c208, %c0_46] : memref<336x128xbf16, #tpu.memory_space<vmem>>, vector<32x32xbf16>
    %158 = arith.truncf %156 : vector<16x32xf32> to vector<16x32xbf16>
    %cst_47 = arith.constant dense<0.000000e+00> : vector<16x32xf32>
    %159 = tpu.matmul %158, %157, %cst_47 {dimension_numbers = #tpu.dot_dimension_numbers<[1], [0], [0], [1], [0, 0, 1, 1], [], []>} : vector<16x32xbf16>, vector<32x32xbf16>, vector<16x32xf32> -> vector<16x32xf32>
    %c200 = arith.constant 200 : index
    %c0_48 = arith.constant 0 : index
    %160 = vector.load %arg2[%c200, %c0_48] : memref<256x128xf32, #tpu.memory_space<vmem>>, vector<1x32xf32>
    %161 = vector.broadcast %160 : vector<1x32xf32> to vector<16x32xf32>
    %162 = arith.addf %159, %161 : vector<16x32xf32>
    %163 = arith.addf %114, %162 : vector<16x32xf32>
    %c208_49 = arith.constant 208 : index
    %c0_50 = arith.constant 0 : index
    %164 = vector.load %arg2[%c208_49, %c0_50] : memref<256x128xf32, #tpu.memory_space<vmem>>, vector<1x32xf32>
    %c216 = arith.constant 216 : index
    %c0_51 = arith.constant 0 : index
    %165 = vector.load %arg2[%c216, %c0_51] : memref<256x128xf32, #tpu.memory_space<vmem>>, vector<1x32xf32>
    %cst_52 = arith.constant dense<0.000000e+00> : vector<16xf32>
    %166 = vector.multi_reduction <add>, %163, %cst_52 [1] : vector<16x32xf32> to vector<16xf32>
    %167 = vector.shape_cast %166 : vector<16xf32> to vector<16x1xf32>
    %cst_53 = arith.constant 3.200000e+01 : f32
    %168 = vector.broadcast %cst_53 : f32 to vector<16x1xf32>
    %169 = arith.divf %167, %168 : vector<16x1xf32>
    %170 = vector.broadcast %169 : vector<16x1xf32> to vector<16x32xf32>
    %171 = arith.subf %163, %170 : vector<16x32xf32>
    %172 = arith.mulf %171, %171 : vector<16x32xf32>
    %cst_54 = arith.constant dense<0.000000e+00> : vector<16xf32>
    %173 = vector.multi_reduction <add>, %172, %cst_54 [1] : vector<16x32xf32> to vector<16xf32>
    %174 = vector.shape_cast %173 : vector<16xf32> to vector<16x1xf32>
    %cst_55 = arith.constant 3.200000e+01 : f32
    %175 = vector.broadcast %cst_55 : f32 to vector<16x1xf32>
    %176 = arith.divf %174, %175 : vector<16x1xf32>
    %cst_56 = arith.constant 9.99999974E-6 : f32
    %177 = vector.broadcast %cst_56 : f32 to vector<16x1xf32>
    %178 = arith.addf %176, %177 : vector<16x1xf32>
    %179 = math.rsqrt %178 : vector<16x1xf32>
    %180 = vector.broadcast %179 : vector<16x1xf32> to vector<16x32xf32>
    %181 = arith.mulf %171, %180 : vector<16x32xf32>
    %182 = vector.broadcast %164 : vector<1x32xf32> to vector<16x32xf32>
    %183 = arith.mulf %181, %182 : vector<16x32xf32>
    %184 = vector.broadcast %165 : vector<1x32xf32> to vector<16x32xf32>
    %185 = arith.addf %183, %184 : vector<16x32xf32>
    %c240 = arith.constant 240 : index
    %c0_57 = arith.constant 0 : index
    %186 = vector.load %arg1[%c240, %c0_57] : memref<336x128xbf16, #tpu.memory_space<vmem>>, vector<32x64xbf16>
    %187 = arith.truncf %185 : vector<16x32xf32> to vector<16x32xbf16>
    %cst_58 = arith.constant dense<0.000000e+00> : vector<16x64xf32>
    %188 = tpu.matmul %187, %186, %cst_58 {dimension_numbers = #tpu.dot_dimension_numbers<[1], [0], [0], [1], [0, 0, 1, 1], [], []>} : vector<16x32xbf16>, vector<32x64xbf16>, vector<16x64xf32> -> vector<16x64xf32>
    %c224 = arith.constant 224 : index
    %c0_59 = arith.constant 0 : index
    %189 = vector.load %arg2[%c224, %c0_59] : memref<256x128xf32, #tpu.memory_space<vmem>>, vector<1x64xf32>
    %190 = vector.broadcast %189 : vector<1x64xf32> to vector<16x64xf32>
    %191 = arith.addf %188, %190 : vector<16x64xf32>
    %cst_60 = arith.constant 0.000000e+00 : f32
    %192 = vector.broadcast %cst_60 : f32 to vector<16x64xf32>
    %193 = arith.maximumf %191, %192 : vector<16x64xf32>
    %c272 = arith.constant 272 : index
    %c0_61 = arith.constant 0 : index
    %194 = vector.load %arg1[%c272, %c0_61] : memref<336x128xbf16, #tpu.memory_space<vmem>>, vector<64x32xbf16>
    %195 = arith.truncf %193 : vector<16x64xf32> to vector<16x64xbf16>
    %cst_62 = arith.constant dense<0.000000e+00> : vector<16x32xf32>
    %196 = tpu.matmul %195, %194, %cst_62 {dimension_numbers = #tpu.dot_dimension_numbers<[1], [0], [0], [1], [0, 0, 1, 1], [], []>} : vector<16x64xbf16>, vector<64x32xbf16>, vector<16x32xf32> -> vector<16x32xf32>
    %c232 = arith.constant 232 : index
    %c0_63 = arith.constant 0 : index
    %197 = vector.load %arg2[%c232, %c0_63] : memref<256x128xf32, #tpu.memory_space<vmem>>, vector<1x32xf32>
    %198 = vector.broadcast %197 : vector<1x32xf32> to vector<16x32xf32>
    %199 = arith.addf %196, %198 : vector<16x32xf32>
    %200 = arith.addf %185, %199 : vector<16x32xf32>
    %c240_64 = arith.constant 240 : index
    %c0_65 = arith.constant 0 : index
    %201 = vector.load %arg2[%c240_64, %c0_65] : memref<256x128xf32, #tpu.memory_space<vmem>>, vector<1x32xf32>
    %c248 = arith.constant 248 : index
    %c0_66 = arith.constant 0 : index
    %202 = vector.load %arg2[%c248, %c0_66] : memref<256x128xf32, #tpu.memory_space<vmem>>, vector<1x32xf32>
    %cst_67 = arith.constant dense<0.000000e+00> : vector<16xf32>
    %203 = vector.multi_reduction <add>, %200, %cst_67 [1] : vector<16x32xf32> to vector<16xf32>
    %204 = vector.shape_cast %203 : vector<16xf32> to vector<16x1xf32>
    %cst_68 = arith.constant 3.200000e+01 : f32
    %205 = vector.broadcast %cst_68 : f32 to vector<16x1xf32>
    %206 = arith.divf %204, %205 : vector<16x1xf32>
    %207 = vector.broadcast %206 : vector<16x1xf32> to vector<16x32xf32>
    %208 = arith.subf %200, %207 : vector<16x32xf32>
    %209 = arith.mulf %208, %208 : vector<16x32xf32>
    %cst_69 = arith.constant dense<0.000000e+00> : vector<16xf32>
    %210 = vector.multi_reduction <add>, %209, %cst_69 [1] : vector<16x32xf32> to vector<16xf32>
    %211 = vector.shape_cast %210 : vector<16xf32> to vector<16x1xf32>
    %cst_70 = arith.constant 3.200000e+01 : f32
    %212 = vector.broadcast %cst_70 : f32 to vector<16x1xf32>
    %213 = arith.divf %211, %212 : vector<16x1xf32>
    %cst_71 = arith.constant 9.99999974E-6 : f32
    %214 = vector.broadcast %cst_71 : f32 to vector<16x1xf32>
    %215 = arith.addf %213, %214 : vector<16x1xf32>
    %216 = math.rsqrt %215 : vector<16x1xf32>
    %217 = vector.broadcast %216 : vector<16x1xf32> to vector<16x32xf32>
    %218 = arith.mulf %208, %217 : vector<16x32xf32>
    %219 = vector.broadcast %201 : vector<1x32xf32> to vector<16x32xf32>
    %220 = arith.mulf %218, %219 : vector<16x32xf32>
    %221 = vector.broadcast %202 : vector<1x32xf32> to vector<16x32xf32>
    %222 = arith.addf %220, %221 : vector<16x32xf32>
    %c80_72 = arith.constant 80 : index
    %c0_73 = arith.constant 0 : index
    %223 = vector.load %arg2[%c80_72, %c0_73] : memref<256x128xf32, #tpu.memory_space<vmem>>, vector<2x16xf32>
    %cst_74 = arith.constant dense<0.000000e+00> : vector<2x32xf32>
    %224 = tpu.matmul %223, %222, %cst_74 {dimension_numbers = #tpu.dot_dimension_numbers<[1], [0], [0], [1], [0, 0, 1, 1], [], []>} : vector<2x16xf32>, vector<16x32xf32>, vector<2x32xf32> -> vector<2x32xf32>
    %c88 = arith.constant 88 : index
    %c0_75 = arith.constant 0 : index
    %225 = vector.load %arg2[%c88, %c0_75] : memref<256x128xf32, #tpu.memory_space<vmem>>, vector<32x1xf32>
    %cst_76 = arith.constant dense<0.000000e+00> : vector<2x1xf32>
    %226 = tpu.matmul %224, %225, %cst_76 {dimension_numbers = #tpu.dot_dimension_numbers<[1], [0], [0], [1], [0, 0, 1, 1], [], []>} : vector<2x32xf32>, vector<32x1xf32>, vector<2x1xf32> -> vector<2x1xf32>
    %c120 = arith.constant 120 : index
    %c0_77 = arith.constant 0 : index
    %227 = vector.load %arg2[%c120, %c0_77] : memref<256x128xf32, #tpu.memory_space<vmem>>, vector<1x1xf32>
    %228 = vector.broadcast %227 : vector<1x1xf32> to vector<2x1xf32>
    %229 = arith.addf %226, %228 : vector<2x1xf32>
    %c0_78 = arith.constant 0 : index
    %c0_79 = arith.constant 0 : index
    %230 = vector.load %arg3[%c0_78, %c0_79] : memref<2x1xf32, #tpu.memory_space<vmem>>, vector<2x1xf32>
    tpu.vector_store %arg3[%c0_78, %c0_79], %229 {strides = array<i32>} : memref<2x1xf32, #tpu.memory_space<vmem>>, vector<2x1xf32>,
    return
  }
}

</mosaic_0001>

<llo_original>
// kernel: tpu_custom_call.1
$region0: #{tpu_custom_call.1}
  #allocation0 [shape = 'u32[]', space=smem, size = 0x4, offset = 0x4, fixed_abs, tag = 'smem constant byte address 0x4 - core index']
  #allocation1 [shape = 'u32[144,128]{1,0:T(1,128)}', space=vmem, size = 0x12000, scoped, tag = 'internal scratch']
  %s0 = inlined_call_operand.hbm [shape: f32[16,16], index: 0, kind: input, shape index: {}]
  %s1 = inlined_call_operand.hbm [shape: bf16[336,128], index: 1, kind: input, shape index: {}]
  %s2 = inlined_call_operand.hbm [shape: f32[256,128], index: 2, kind: input, shape index: {}]
  %s3 = inlined_call_operand.vmem [shape: f32[2,1], index: 3, kind: output, shape index: {}]
  %s4 = sld [smem:[#allocation0]]
  $region34: #{tpu_custom_call.1} parent=0
    _
  %s6 = ssub.s32 1, %s4
  %s7 = scalar_select 0, %s6, %s4
  $region1: #{tpu_custom_call.1} parent=0
    #allocation2 [shape = 'u8[8192]{0}', space=vmem, size = 0x2000, scoped, tag = 'input window, operand 0, single buffered']
    #allocation3 [shape = 's32[1]{0}', space=sflag, size = 0x4, scoped, tag = 'scoped memory for tpu_custom_call.1']
    #allocation4 [shape = 'u8[86016]{0}', space=vmem, size = 0x15000, scoped, tag = 'input window, operand 1, single buffered']
    #allocation5 [shape = 's32[1]{0}', space=sflag, size = 0x4, scoped, tag = 'scoped memory for tpu_custom_call.1']
    #allocation6 [shape = 'u8[131072]{0}', space=vmem, size = 0x20000, scoped, tag = 'input window, operand 2, single buffered']
    %8 = vsyncpa [#allocation3], 0
    %9 = vsyncpa [#allocation5], 0
    // Predicated region
    $region2: #{tpu_custom_call.1} parent=1 // pred_check
      _
    $region3: #{tpu_custom_call.1} parent=1 // pred_check_branch
      %11 = sbr.rel (0) target = $region5
    $region4: #{tpu_custom_call.1} parent=1 // pred_region
      %s13 = ssub.s32 256, 256
      %14 = vsyncadd [#allocation3], %s13
      %s15 = sshll.u32 [#allocation2], 4
      %s16 = int_to_ptr.vmem [resolvable:$true] %s15
      %21 = dma.hbm_to_vmem [thread:$0]  %s0, 256, %s16, [#allocation3], 128, 128, 8
    $region5: #{tpu_custom_call.1} parent=1 // pred_fallthru
      _
    // Predicated region
    $region6: #{tpu_custom_call.1} parent=1 // pred_check
      _
    $region7: #{tpu_custom_call.1} parent=1 // pred_check_branch
      %23 = sbr.rel (0) target = $region9
    $region8: #{tpu_custom_call.1} parent=1 // pred_region
      %s25 = ssub.s32 2688, 2688
      %26 = vsyncadd [#allocation5], %s25
      %s27 = sshll.u32 [#allocation4], 4
      %s28 = int_to_ptr.vmem [resolvable:$true] %s27
      %33 = dma.hbm_to_vmem [thread:$0]  %s1, 2688, %s28, [#allocation5], 64, 64, 4
    $region9: #{tpu_custom_call.1} parent=1 // pred_fallthru
      _
    // Predicated region
    $region10: #{tpu_custom_call.1} parent=1 // pred_check
      _
    $region11: #{tpu_custom_call.1} parent=1 // pred_check_branch
      %35 = sbr.rel (0) target = $region13
    $region12: #{tpu_custom_call.1} parent=1 // pred_region
      %s37 = ssub.s32 4096, 4096
      %38 = vsyncadd [#allocation5], %s37
      %s39 = sshll.u32 [#allocation6], 4
      %s40 = int_to_ptr.vmem [resolvable:$true] %s39
      %45 = dma.hbm_to_vmem [thread:$0]  %s2, 4096, %s40, [#allocation5], 128, 128, 8
    $region13: #{tpu_custom_call.1} parent=1 // pred_fallthru
      _
    // Predicated region
    $region14: #{tpu_custom_call.1} parent=1 // pred_check
      _
    $region15: #{tpu_custom_call.1} parent=1 // pred_check_branch
      %47 = sbr.rel (0) target = $region17
    $region16: #{tpu_custom_call.1} parent=1 // pred_region
      %48 = dma.done [#allocation3], 256
    $region17: #{tpu_custom_call.1} parent=1 // pred_fallthru
      _
    // Predicated region
    $region18: #{tpu_custom_call.1} parent=1 // pred_check
      _
    $region19: #{tpu_custom_call.1} parent=1 // pred_check_branch
      %50 = sbr.rel (0) target = $region21
    $region20: #{tpu_custom_call.1} parent=1 // pred_region
      %51 = dma.done [#allocation5], 2688
    $region21: #{tpu_custom_call.1} parent=1 // pred_fallthru
      _
    // Predicated region
    $region22: #{tpu_custom_call.1} parent=1 // pred_check
      _
    $region23: #{tpu_custom_call.1} parent=1 // pred_check_branch
      %53 = sbr.rel (0) target = $region25
    $region24: #{tpu_custom_call.1} parent=1 // pred_region
      %54 = dma.done [#allocation5], 4096
    $region25: #{tpu_custom_call.1} parent=1 // pred_fallthru
      _
    %v56 = vld [vmem:[#allocation2] sm:$0xff]
    %v57 = vld [vmem:[#allocation2 + $0x8] sm:$0xff]
    %v58 = vld [vmem:[#allocation4] sm:$0xf]
    %v59 = vld [vmem:[#allocation4 + $0x4] sm:$0xf]
    %v60 = vpack.c.bf16 %v57, %v56
    %v61 = vld [vmem:[#allocation6] sm:$0xff]
    %v62 = vld [vmem:[#allocation6 + $0x8] sm:$0xff]
    %v65 = vunpack.c.l.b16 %v58
    %v66 = vunpack.c.l.b16 %v59
    %v67 = vpack.c.b16 %v66, %v65
    %vm69 = vcmask 130048
    %v71 = vsel %vm69, %v60, 0
    %73 = vmatprep.subr.bf16.mxu0 0
    %74 = vmatpush1.bf16.msra.mxu0 0
    %75 = vmatprep.subr.bf16.mxu0 0
    %76 = vmatpush1.bf16.msra.mxu0 0
    %77 = vmatprep.subr.bf16.mxu0 0
    %78 = vmatpush1.bf16.msra.mxu0 0
    %79 = vmatprep.subr.bf16.mxu0 0
    %80 = vmatpush1.bf16.msra.mxu0 0
    %81 = vmatprep.subr.bf16.mxu0 0
    %82 = vmatpush1.bf16.msra.mxu0 0
    %83 = vmatprep.subr.bf16.mxu0 0
    %84 = vmatpush1.bf16.msra.mxu0 0
    %85 = vmatprep.subr.bf16.mxu0 0
    %86 = vmatpush1.bf16.msra.mxu0 0
    %87 = vmatprep.subr.bf16.mxu0 0
    %88 = vmatpush1.bf16.msra.mxu0 %v67
    %89 = vmatprep.subr.bf16.mxu0 0
    %90 = vmatpush2.bf16.msra.mxu0 0
    %91 = vmatprep.subr.bf16.mxu0 0
    %92 = vmatpush2.bf16.msra.mxu0 0
    %93 = vmatprep.subr.bf16.mxu0 0
    %94 = vmatpush2.bf16.msra.mxu0 0
    %95 = vmatprep.subr.bf16.mxu0 0
    %96 = vmatpush2.bf16.msra.mxu0 0
    %97 = vmatprep.subr.bf16.mxu0 0
    %98 = vmatpush2.bf16.msra.mxu0 0
    %99 = vmatprep.subr.bf16.mxu0 0
    %100 = vmatpush2.bf16.msra.mxu0 0
    %101 = vmatprep.subr.bf16.mxu0 0
    %102 = vmatpush2.bf16.msra.mxu0 0
    %103 = vmatprep.subr.bf16.mxu0 0
    %104 = vmatpush2.bf16.msra.mxu0 0
    %105 = vmatprep.mubr.bf16.mxu0 0
    %106 = vmatmul.mubr.bf16.gmra.mxu0 %v71
    %v107 = vpop.f32.mrf.mxu0
    %v108 = vadd.f32 %v61, %v107
    %v109 = vpop.f32.mrf.mxu0
    %v110 = vpop.f32.mrf.mxu0
    %v111 = vadd.f32 %v62, %v110
    %v112 = vpop.f32.mrf.mxu0
    %113 = vdwg.mxu0
    %v114 = vld [vmem:[#allocation6 + $0x10] sm:$0xff]
    %v115 = vld [vmem:[#allocation6 + $0x18] sm:$0xff]
    %v116 = vld [vmem:[#allocation6 + $0x20] sm:$0xff]
    %v117 = vld [vmem:[#allocation6 + $0x28] sm:$0xff]
    %v118 = vld [vmem:[#allocation6 + $0x30] sm:$0xff]
    %v119 = vld [vmem:[#allocation6 + $0x38] sm:$0xff]
    %v120 = vld [vmem:[#allocation6 + $0x40] sm:$0xff]
    %v121 = vld [vmem:[#allocation6 + $0x48] sm:$0xff]
    %v122 = vld [vmem:[#allocation4 + $0x8] sm:$0xf]
    %v123 = vld [vmem:[#allocation4 + $0xc] sm:$0xf]
    %v124 = vld [vmem:[#allocation4 + $0x10] sm:$0xf]
    %v125 = vld [vmem:[#allocation4 + $0x14] sm:$0xf]
    %v126 = vpack.c.bf16 %v111, %v108
    %v127 = vld [vmem:[#allocation6 + $0x80] sm:$0x1]
    %v128 = vlaneseq
    %v129 = vshrl.u32 %v128, 7
    %v130 = vsub.s32 0, %v129
    %v131 = vrot.slane %v127, %v130
    %v136 = vunpack.c.l.b16 %v122
    %v137 = vunpack.c.l.b16 %v123
    %v138 = vunpack.c.l.b16 %v124
    %v139 = vunpack.c.l.b16 %v125
    %v140 = vpack.c.b16 %v137, %v136
    %v141 = vpack.c.b16 %v139, %v138
    %vm144 = vcmask 261120
    %v146 = vsel %vm144, %v126, 0
    %148 = vmatprep.subr.bf16.mxu0 0
    %149 = vmatpush1.bf16.msra.mxu0 0
    %150 = vmatprep.subr.bf16.mxu0 0
    %151 = vmatpush1.bf16.msra.mxu0 0
    %152 = vmatprep.subr.bf16.mxu0 0
    %153 = vmatpush1.bf16.msra.mxu0 0
    %154 = vmatprep.subr.bf16.mxu0 0
    %155 = vmatpush1.bf16.msra.mxu0 0
    %156 = vmatprep.subr.bf16.mxu0 0
    %157 = vmatpush1.bf16.msra.mxu0 0
    %158 = vmatprep.subr.bf16.mxu0 0
    %159 = vmatpush1.bf16.msra.mxu0 0
    %160 = vmatprep.subr.bf16.mxu0 0
    %161 = vmatpush1.bf16.msra.mxu0 %v141
    %162 = vmatprep.subr.bf16.mxu0 0
    %163 = vmatpush1.bf16.msra.mxu0 %v140
    %164 = vmatprep.subr.bf16.mxu0 0
    %165 = vmatpush2.bf16.msra.mxu0 0
    %166 = vmatprep.subr.bf16.mxu0 0
    %167 = vmatpush2.bf16.msra.mxu0 0
    %168 = vmatprep.subr.bf16.mxu0 0
    %169 = vmatpush2.bf16.msra.mxu0 0
    %170 = vmatprep.subr.bf16.mxu0 0
    %171 = vmatpush2.bf16.msra.mxu0 0
    %172 = vmatprep.subr.bf16.mxu0 0
    %173 = vmatpush2.bf16.msra.mxu0 0
    %174 = vmatprep.subr.bf16.mxu0 0
    %175 = vmatpush2.bf16.msra.mxu0 0
    %176 = vmatprep.subr.bf16.mxu0 0
    %177 = vmatpush2.bf16.msra.mxu0 0
    %178 = vmatprep.subr.bf16.mxu0 0
    %179 = vmatpush2.bf16.msra.mxu0 0
    %180 = vmatprep.mubr.bf16.mxu0 0
    %181 = vmatmul.mubr.bf16.gmra.mxu0 %v146
    %v182 = vpop.f32.mrf.mxu0
    %v183 = vadd.f32 %v131, %v182
    %v184 = vpop.f32.mrf.mxu0
    %v185 = vpop.f32.mrf.mxu0
    %v186 = vadd.f32 %v131, %v185
    %v187 = vpop.f32.mrf.mxu0
    %188 = vdwg.mxu0
    %191 = vrot.lane.b32.xlu0 %v183, 120
    %v192 = vpop.permute.xlu0 %191
    %193 = vrot.lane.b32.xlu0 %v186, 120
    %v194 = vpop.permute.xlu0 %193
    %197 = vrot.lane.b32.xlu0 %v183, 112
    %v198 = vpop.permute.xlu0 %197
    %199 = vrot.lane.b32.xlu0 %v186, 112
    %v200 = vpop.permute.xlu0 %199
    %203 = vrot.lane.b32.xlu0 %v183, 104
    %v204 = vpop.permute.xlu0 %203
    %205 = vrot.lane.b32.xlu0 %v186, 104
    %v206 = vpop.permute.xlu0 %205
    %v209 = vpack.c.bf16 %v186, %v183
    %v210 = vpack.c.bf16 %v194, %v192
    %v211 = vpack.c.bf16 %v200, %v198
    %v212 = vpack.c.bf16 %v206, %v204
    %217 = vrot.lane.b32.xlu0 %v209, 96
    %v218 = vpop.permute.xlu0 %217
    %219 = vrot.lane.b32.xlu0 %v210, 96
    %v220 = vpop.permute.xlu0 %219
    %221 = vrot.lane.b32.xlu0 %v211, 96
    %v222 = vpop.permute.xlu0 %221
    %223 = vrot.lane.b32.xlu0 %v212, 96
    %v224 = vpop.permute.xlu0 %223
    %vm225 = vcmask 64512
    %v227 = vsel %vm225, %v209, 0
    %v230 = vsel %vm225, %v210, 0
    %v233 = vsel %vm225, %v211, 0
    %v236 = vsel %vm225, %v212, 0
    %v239 = vsel %vm225, %v218, 0
    %v242 = vsel %vm225, %v220, 0
    %v245 = vsel %vm225, %v222, 0
    %v248 = vsel %vm225, %v224, 0
    %250 = vmatprep.subr.bf16.mxu0 0
    %251 = vmatpush1.bf16.xpose.msra.mxu0 0
    %252 = vmatprep.subr.bf16.mxu0 0
    %253 = vmatpush1.bf16.xpose.msra.mxu0 0
    %254 = vmatprep.subr.bf16.mxu0 0
    %255 = vmatpush1.bf16.xpose.msra.mxu0 0
    %256 = vmatprep.subr.bf16.mxu0 0
    %257 = vmatpush1.bf16.xpose.msra.mxu0 0
    %258 = vmatprep.subr.bf16.mxu0 0
    %259 = vmatpush1.bf16.xpose.msra.mxu0 %v248
    %260 = vmatprep.subr.bf16.mxu0 0
    %261 = vmatpush1.bf16.xpose.msra.mxu0 %v245
    %262 = vmatprep.subr.bf16.mxu0 0
    %263 = vmatpush1.bf16.xpose.msra.mxu0 %v242
    %264 = vmatprep.subr.bf16.mxu0 0
    %265 = vmatpush1.bf16.xpose.msra.mxu0 %v239
    %266 = vmatprep.subr.bf16.mxu0 0
    %267 = vmatpush2.bf16.xpose.msra.mxu0 0
    %268 = vmatprep.subr.bf16.mxu0 0
    %269 = vmatpush2.bf16.xpose.msra.mxu0 0
    %270 = vmatprep.subr.bf16.mxu0 0
    %271 = vmatpush2.bf16.xpose.msra.mxu0 0
    %272 = vmatprep.subr.bf16.mxu0 0
    %273 = vmatpush2.bf16.xpose.msra.mxu0 0
    %274 = vmatprep.subr.bf16.mxu0 0
    %275 = vmatpush2.bf16.xpose.msra.mxu0 0
    %276 = vmatprep.subr.bf16.mxu0 0
    %277 = vmatpush2.bf16.xpose.msra.mxu0 0
    %278 = vmatprep.subr.bf16.mxu0 0
    %279 = vmatpush2.bf16.xpose.msra.mxu0 0
    %280 = vmatprep.subr.bf16.mxu0 0
    %281 = vmatpush2.bf16.xpose.msra.mxu0 0
    %282 = vmatprep.mubr.bf16.mxu0 0
    %283 = vmatmul.mubr.bf16.gmra.mxu0 %v227
    %v284 = vpop.f32.mrf.mxu0
    %v285 = vadd.f32 %v114, %v284
    %v286 = vpop.f32.mrf.mxu0
    %v287 = vpop.f32.mrf.mxu0
    %v288 = vadd.f32 %v115, %v287
    %v289 = vpop.f32.mrf.mxu0
    %290 = vmatprep.mubr.bf16.mxu0 0
    %291 = vmatmul.mubr.bf16.gmra.mxu0 %v230
    %v292 = vpop.f32.mrf.mxu0
    %v293 = vadd.f32 %v116, %v292
    %v294 = vpop.f32.mrf.mxu0
    %v295 = vpop.f32.mrf.mxu0
    %v296 = vadd.f32 %v117, %v295
    %v297 = vpop.f32.mrf.mxu0
    %298 = vmatprep.mubr.bf16.mxu0 0
    %299 = vmatmul.mubr.bf16.gmra.mxu0 %v233
    %v300 = vpop.f32.mrf.mxu0
    %v301 = vadd.f32 %v118, %v300
    %v302 = vpop.f32.mrf.mxu0
    %v303 = vpop.f32.mrf.mxu0
    %v304 = vadd.f32 %v119, %v303
    %v305 = vpop.f32.mrf.mxu0
    %306 = vmatprep.mubr.bf16.mxu0 0
    %307 = vmatmul.mubr.bf16.gmra.mxu0 %v236
    %v308 = vpop.f32.mrf.mxu0
    %v309 = vadd.f32 %v120, %v308
    %v310 = vpop.f32.mrf.mxu0
    %v311 = vpop.f32.mrf.mxu0
    %v312 = vadd.f32 %v121, %v311
    %v313 = vpop.f32.mrf.mxu0
    %314 = vdwg.mxu0
    %vm315 = vcmask 523264
    %v316 = vsel %vm315, %v285, -inf
    %317 = vmax.xlane.f32.xlu0 %v316
    %v318 = vpop.xlane.xlu0 %317
    %v319 = vsel %vm315, %v288, -inf
    %320 = vmax.xlane.f32.xlu0 %v319
    %v321 = vpop.xlane.xlu0 %320
    %v322 = vsel %vm315, %v293, -inf
    %323 = vmax.xlane.f32.xlu0 %v322
    %v324 = vpop.xlane.xlu0 %323
    %v325 = vsel %vm315, %v296, -inf
    %326 = vmax.xlane.f32.xlu0 %v325
    %v327 = vpop.xlane.xlu0 %326
    %v328 = vsel %vm315, %v301, -inf
    %329 = vmax.xlane.f32.xlu0 %v328
    %v330 = vpop.xlane.xlu0 %329
    %v331 = vsel %vm315, %v304, -inf
    %332 = vmax.xlane.f32.xlu0 %v331
    %v333 = vpop.xlane.xlu0 %332
    %v334 = vsel %vm315, %v309, -inf
    %335 = vmax.xlane.f32.xlu0 %v334
    %v336 = vpop.xlane.xlu0 %335
    %v337 = vsel %vm315, %v312, -inf
    %338 = vmax.xlane.f32.xlu0 %v337
    %v339 = vpop.xlane.xlu0 %338
    %v340 = vsub.f32 %v285, %v318
    %v341 = vsub.f32 %v288, %v321
    %v342 = vsub.f32 %v293, %v324
    %v343 = vsub.f32 %v296, %v327
    %v344 = vsub.f32 %v301, %v330
    %v345 = vsub.f32 %v304, %v333
    %v346 = vsub.f32 %v309, %v336
    %v347 = vsub.f32 %v312, %v339
    %v348 = vmul.f32 %v340, 1.442695
    %v349 = vpow.pop %v348
    %v350 = vmul.f32 %v341, 1.442695
    %v351 = vpow.pop %v350
    %v352 = vmul.f32 %v342, 1.442695
    %v353 = vpow.pop %v352
    %v354 = vmul.f32 %v343, 1.442695
    %v355 = vpow.pop %v354
    %v356 = vmul.f32 %v344, 1.442695
    %v357 = vpow.pop %v356
    %v358 = vmul.f32 %v345, 1.442695
    %v359 = vpow.pop %v358
    %v360 = vmul.f32 %v346, 1.442695
    %v361 = vpow.pop %v360
    %v362 = vmul.f32 %v347, 1.442695
    %v363 = vpow.pop %v362
    %v364 = vsel %vm315, %v349, 0.0
    %365 = vadd.xlane.f32.xlu0 %v364
    %v366 = vpop.xlane.xlu0 %365
    %v367 = vsel %vm315, %v351, 0.0
    %368 = vadd.xlane.f32.xlu0 %v367
    %v369 = vpop.xlane.xlu0 %368
    %v370 = vsel %vm315, %v353, 0.0
    %371 = vadd.xlane.f32.xlu0 %v370
    %v372 = vpop.xlane.xlu0 %371
    %v373 = vsel %vm315, %v355, 0.0
    %374 = vadd.xlane.f32.xlu0 %v373
    %v375 = vpop.xlane.xlu0 %374
    %v376 = vsel %vm315, %v357, 0.0
    %377 = vadd.xlane.f32.xlu0 %v376
    %v378 = vpop.xlane.xlu0 %377
    %v379 = vsel %vm315, %v359, 0.0
    %380 = vadd.xlane.f32.xlu0 %v379
    %v381 = vpop.xlane.xlu0 %380
    %v382 = vsel %vm315, %v361, 0.0
    %383 = vadd.xlane.f32.xlu0 %v382
    %v384 = vpop.xlane.xlu0 %383
    %v385 = vsel %vm315, %v363, 0.0
    %386 = vadd.xlane.f32.xlu0 %v385
    %v387 = vpop.xlane.xlu0 %386
    %v388 = vrcp.pop %v366
    %v389 = vrcp.pop %v369
    %v390 = vrcp.pop %v372
    %v391 = vrcp.pop %v375
    %v392 = vrcp.pop %v378
    %v393 = vrcp.pop %v381
    %v394 = vrcp.pop %v384
    %v395 = vrcp.pop %v387
    %v396 = vmul.f32 %v349, %v388
    %v397 = vmul.f32 %v351, %v389
    %v398 = vmul.f32 %v353, %v390
    %v399 = vmul.f32 %v355, %v391
    %v400 = vmul.f32 %v357, %v392
    %v401 = vmul.f32 %v359, %v393
    %v402 = vmul.f32 %v361, %v394
    %v403 = vmul.f32 %v363, %v395
    %v404 = vpack.c.bf16 %v397, %v396
    %v405 = vpack.c.bf16 %v399, %v398
    %v406 = vpack.c.bf16 %v401, %v400
    %v407 = vpack.c.bf16 %v403, %v402
    %408 = vrot.lane.b32.xlu0 %v183, 64
    %v409 = vpop.permute.xlu0 %408
    %410 = vrot.lane.b32.xlu0 %v186, 64
    %v411 = vpop.permute.xlu0 %410
    %412 = vrot.lane.b32.xlu0 %v192, 64
    %v413 = vpop.permute.xlu0 %412
    %414 = vrot.lane.b32.xlu0 %v194, 64
    %v415 = vpop.permute.xlu0 %414
    %416 = vrot.lane.b32.xlu0 %v198, 64
    %v417 = vpop.permute.xlu0 %416
    %418 = vrot.lane.b32.xlu0 %v200, 64
    %v419 = vpop.permute.xlu0 %418
    %420 = vrot.lane.b32.xlu0 %v204, 64
    %v421 = vpop.permute.xlu0 %420
    %422 = vrot.lane.b32.xlu0 %v206, 64
    %v423 = vpop.permute.xlu0 %422
    %v433 = vsel %vm315, %v404, 0
    %v436 = vsel %vm315, %v405, 0
    %v439 = vsel %vm315, %v406, 0
    %v442 = vsel %vm315, %v407, 0
    %444 = vmatprep.subr.mxu0 0.0
    %445 = vmatpush1.msra.mxu0 0.0
    %446 = vmatprep.subr.mxu0 0.0
    %447 = vmatpush1.msra.mxu0 0.0
    %448 = vmatprep.subr.mxu0 0.0
    %449 = vmatpush1.msra.mxu0 0.0
    %450 = vmatprep.subr.mxu0 0.0
    %451 = vmatpush1.msra.mxu0 0.0
    %452 = vmatprep.subr.mxu0 0.0
    %453 = vmatpush1.msra.mxu0 0.0
    %454 = vmatprep.subr.mxu0 0.0
    %455 = vmatpush1.msra.mxu0 0.0
    %456 = vmatprep.subr.mxu0 0.0
    %457 = vmatpush1.msra.mxu0 0.0
    %458 = vmatprep.subr.mxu0 0.0
    %459 = vmatpush1.msra.mxu0 0.0
    %460 = vmatprep.subr.mxu0 0.0
    %461 = vmatpush1.msra.mxu0 %v423
    %462 = vmatprep.subr.mxu0 0.0
    %463 = vmatpush1.msra.mxu0 %v421
    %464 = vmatprep.subr.mxu0 0.0
    %465 = vmatpush1.msra.mxu0 %v419
    %466 = vmatprep.subr.mxu0 0.0
    %467 = vmatpush1.msra.mxu0 %v417
    %468 = vmatprep.subr.mxu0 0.0
    %469 = vmatpush1.msra.mxu0 %v415
    %470 = vmatprep.subr.mxu0 0.0
    %471 = vmatpush1.msra.mxu0 %v413
    %472 = vmatprep.subr.mxu0 0.0
    %473 = vmatpush1.msra.mxu0 %v411
    %474 = vmatprep.subr.mxu0 0.0
    %475 = vmatpush1.msra.mxu0 %v409
    %476 = vmatprep.subr.mxu0 0.0
    %477 = vmatpush2.msra.mxu0 0.0
    %478 = vmatprep.subr.mxu0 0.0
    %479 = vmatpush2.msra.mxu0 0.0
    %480 = vmatprep.subr.mxu0 0.0
    %481 = vmatpush2.msra.mxu0 0.0
    %482 = vmatprep.subr.mxu0 0.0
    %483 = vmatpush2.msra.mxu0 0.0
    %484 = vmatprep.subr.mxu0 0.0
    %485 = vmatpush2.msra.mxu0 0.0
    %486 = vmatprep.subr.mxu0 0.0
    %487 = vmatpush2.msra.mxu0 0.0
    %488 = vmatprep.subr.mxu0 0.0
    %489 = vmatpush2.msra.mxu0 0.0
    %490 = vmatprep.subr.mxu0 0.0
    %491 = vmatpush2.msra.mxu0 0.0
    %492 = vmatprep.subr.mxu0 0.0
    %493 = vmatpush2.msra.mxu0 0.0
    %494 = vmatprep.subr.mxu0 0.0
    %495 = vmatpush2.msra.mxu0 0.0
    %496 = vmatprep.subr.mxu0 0.0
    %497 = vmatpush2.msra.mxu0 0.0
    %498 = vmatprep.subr.mxu0 0.0
    %499 = vmatpush2.msra.mxu0 0.0
    %500 = vmatprep.subr.mxu0 0.0
    %501 = vmatpush2.msra.mxu0 0.0
    %502 = vmatprep.subr.mxu0 0.0
    %503 = vmatpush2.msra.mxu0 0.0
    %504 = vmatprep.subr.mxu0 0.0
    %505 = vmatpush2.msra.mxu0 0.0
    %506 = vmatprep.subr.mxu0 0.0
    %507 = vmatpush2.msra.mxu0 0.0
    %508 = vmatprep.mubr.bf16.mxu0 0
    %509 = vmatmul.mubr.bf16.gmra.mxu0 %v433
    %v510 = vpop.f32.mrf.mxu0
    %v511 = vadd.f32 0.0, %v510
    %v512 = vpop.f32.mrf.mxu0
    %v513 = vpop.f32.mrf.mxu0
    %v514 = vadd.f32 0.0, %v513
    %v515 = vpop.f32.mrf.mxu0
    %516 = vmatprep.mubr.bf16.mxu0 0
    %517 = vmatmul.mubr.bf16.gmra.mxu0 %v436
    %v518 = vpop.f32.mrf.mxu0
    %v519 = vadd.f32 0.0, %v518
    %v520 = vpop.f32.mrf.mxu0
    %v521 = vpop.f32.mrf.mxu0
    %v522 = vadd.f32 0.0, %v521
    %v523 = vpop.f32.mrf.mxu0
    %524 = vmatprep.mubr.bf16.mxu0 0
    %525 = vmatmul.mubr.bf16.gmra.mxu0 %v439
    %v526 = vpop.f32.mrf.mxu0
    %v527 = vadd.f32 0.0, %v526
    %v528 = vpop.f32.mrf.mxu0
    %v529 = vpop.f32.mrf.mxu0
    %v530 = vadd.f32 0.0, %v529
    %v531 = vpop.f32.mrf.mxu0
    %532 = vmatprep.mubr.bf16.mxu0 0
    %533 = vmatmul.mubr.bf16.gmra.mxu0 %v442
    %v534 = vpop.f32.mrf.mxu0
    %v535 = vadd.f32 0.0, %v534
    %v536 = vpop.f32.mrf.mxu0
    %v537 = vpop.f32.mrf.mxu0
    %v538 = vadd.f32 0.0, %v537
    %v539 = vpop.f32.mrf.mxu0
    %540 = vdwg.mxu0
    %543 = vrot.lane.b32.xlu0 %v519, 8
    %v544 = vpop.permute.xlu0 %543
    %545 = vrot.lane.b32.xlu0 %v522, 8
    %v546 = vpop.permute.xlu0 %545
    %551 = vrot.lane.b32.xlu0 %v527, 16
    %v552 = vpop.permute.xlu0 %551
    %553 = vrot.lane.b32.xlu0 %v530, 16
    %v554 = vpop.permute.xlu0 %553
    %559 = vrot.lane.b32.xlu0 %v535, 24
    %v560 = vpop.permute.xlu0 %559
    %561 = vrot.lane.b32.xlu0 %v538, 24
    %v562 = vpop.permute.xlu0 %561
    %v565 = vsel %vm225, %v511, %v544
    %v566 = vsel %vm225, %v514, %v546
    %v567 = vsel %vm69, %v565, %v552
    %v568 = vsel %vm69, %v566, %v554
    %vm569 = vcmask 195584
    %v570 = vsel %vm569, %v567, %v560
    %v571 = vsel %vm569, %v568, %v562
    %v572 = vld [vmem:[#allocation4 + $0x18] sm:$0xf]
    %v573 = vld [vmem:[#allocation4 + $0x1c] sm:$0xf]
    %v574 = vld [vmem:[#allocation4 + $0x20] sm:$0xf]
    %v575 = vld [vmem:[#allocation4 + $0x24] sm:$0xf]
    %v576 = vpack.c.bf16 %v571, %v570
    %v577 = vld [vmem:[#allocation6 + $0x88] sm:$0x1]
    %v578 = vlaneseq
    %v579 = vshrl.u32 %v578, 7
    %v580 = vsub.s32 0, %v579
    %v581 = vrot.slane %v577, %v580
    %v586 = vunpack.c.l.b16 %v572
    %v587 = vunpack.c.l.b16 %v573
    %v588 = vunpack.c.l.b16 %v574
    %v589 = vunpack.c.l.b16 %v575
    %v590 = vpack.c.b16 %v587, %v586
    %v591 = vpack.c.b16 %v589, %v588
    %v595 = vsel %vm144, %v576, 0
    %597 = vmatprep.subr.bf16.mxu0 0
    %598 = vmatpush1.bf16.msra.mxu0 0
    %599 = vmatprep.subr.bf16.mxu0 0
    %600 = vmatpush1.bf16.msra.mxu0 0
    %601 = vmatprep.subr.bf16.mxu0 0
    %602 = vmatpush1.bf16.msra.mxu0 0
    %603 = vmatprep.subr.bf16.mxu0 0
    %604 = vmatpush1.bf16.msra.mxu0 0
    %605 = vmatprep.subr.bf16.mxu0 0
    %606 = vmatpush1.bf16.msra.mxu0 0
    %607 = vmatprep.subr.bf16.mxu0 0
    %608 = vmatpush1.bf16.msra.mxu0 0
    %609 = vmatprep.subr.bf16.mxu0 0
    %610 = vmatpush1.bf16.msra.mxu0 %v591
    %611 = vmatprep.subr.bf16.mxu0 0
    %612 = vmatpush1.bf16.msra.mxu0 %v590
    %613 = vmatprep.subr.bf16.mxu0 0
    %614 = vmatpush2.bf16.msra.mxu0 0
    %615 = vmatprep.subr.bf16.mxu0 0
    %616 = vmatpush2.bf16.msra.mxu0 0
    %617 = vmatprep.subr.bf16.mxu0 0
    %618 = vmatpush2.bf16.msra.mxu0 0
    %619 = vmatprep.subr.bf16.mxu0 0
    %620 = vmatpush2.bf16.msra.mxu0 0
    %621 = vmatprep.subr.bf16.mxu0 0
    %622 = vmatpush2.bf16.msra.mxu0 0
    %623 = vmatprep.subr.bf16.mxu0 0
    %624 = vmatpush2.bf16.msra.mxu0 0
    %625 = vmatprep.subr.bf16.mxu0 0
    %626 = vmatpush2.bf16.msra.mxu0 0
    %627 = vmatprep.subr.bf16.mxu0 0
    %628 = vmatpush2.bf16.msra.mxu0 0
    %629 = vmatprep.mubr.bf16.mxu0 0
    %630 = vmatmul.mubr.bf16.gmra.mxu0 %v595
    %v631 = vpop.f32.mrf.mxu0
    %v632 = vadd.f32 %v581, %v631
    %v633 = vpop.f32.mrf.mxu0
    %v634 = vpop.f32.mrf.mxu0
    %v635 = vadd.f32 %v581, %v634
    %v636 = vpop.f32.mrf.mxu0
    %637 = vdwg.mxu0
    %v638 = vadd.f32 %v108, %v632
    %v639 = vadd.f32 %v111, %v635
    %v640 = vld [vmem:[#allocation6 + $0x90] sm:$0x1]
    %v641 = vld [vmem:[#allocation6 + $0x98] sm:$0x1]
    %v642 = vsel %vm144, %v638, 0.0
    %643 = vadd.xlane.f32.xlu0 %v642
    %v644 = vpop.xlane.xlu0 %643
    %v645 = vsel %vm144, %v639, 0.0
    %646 = vadd.xlane.f32.xlu0 %v645
    %v647 = vpop.xlane.xlu0 %646
    %v648 = vrcp.pop 32.0
    %v649 = vmul.f32 %v644, %v648
    %v650 = vmul.f32 %v647, %v648
    %v651 = vsub.f32 %v638, %v649
    %v652 = vsub.f32 %v639, %v650
    %v653 = vmul.f32 %v651, %v651
    %v654 = vmul.f32 %v652, %v652
    %v655 = vsel %vm144, %v653, 0.0
    %656 = vadd.xlane.f32.xlu0 %v655
    %v657 = vpop.xlane.xlu0 %656
    %v658 = vsel %vm144, %v654, 0.0
    %659 = vadd.xlane.f32.xlu0 %v658
    %v660 = vpop.xlane.xlu0 %659
    %v661 = vmul.f32 %v657, %v648
    %v662 = vmul.f32 %v660, %v648
    %v663 = vadd.f32 %v661, 1e-05
    %v664 = vadd.f32 %v662, 1e-05
    %v665 = vrsqrt.pop %v663
    %v666 = vrsqrt.pop %v664
    %v667 = vmul.f32 %v651, %v665
    %v668 = vmul.f32 %v652, %v666
    %v669 = vlaneseq
    %v670 = vshrl.u32 %v669, 7
    %v671 = vsub.s32 0, %v670
    %v672 = vrot.slane %v640, %v671
    %v673 = vmul.f32 %v667, %v672
    %v674 = vmul.f32 %v668, %v672
    %v675 = vlaneseq
    %v676 = vshrl.u32 %v675, 7
    %v677 = vsub.s32 0, %v676
    %v678 = vrot.slane %v641, %v677
    %v679 = vadd.f32 %v673, %v678
    %v680 = vadd.f32 %v674, %v678
    %v681 = vld [vmem:[#allocation4 + $0x28] sm:$0xf]
    %v682 = vld [vmem:[#allocation4 + $0x2c] sm:$0xf]
    %v683 = vld [vmem:[#allocation4 + $0x30] sm:$0xf]
    %v684 = vld [vmem:[#allocation4 + $0x34] sm:$0xf]
    %v685 = vpack.c.bf16 %v680, %v679
    %v686 = vld [vmem:[#allocation6 + $0xa0] sm:$0x1]
    %v687 = vlaneseq
    %v688 = vshrl.u32 %v687, 7
    %v689 = vsub.s32 0, %v688
    %v690 = vrot.slane %v686, %v689
    %v695 = vunpack.c.l.b16 %v681
    %v696 = vunpack.c.l.b16 %v682
    %v697 = vunpack.c.l.b16 %v683
    %v698 = vunpack.c.l.b16 %v684
    %v699 = vpack.c.b16 %v696, %v695
    %v700 = vpack.c.b16 %v698, %v697
    %v704 = vsel %vm144, %v685, 0
    %706 = vmatprep.subr.bf16.mxu0 0
    %707 = vmatpush1.bf16.msra.mxu0 0
    %708 = vmatprep.subr.bf16.mxu0 0
    %709 = vmatpush1.bf16.msra.mxu0 0
    %710 = vmatprep.subr.bf16.mxu0 0
    %711 = vmatpush1.bf16.msra.mxu0 0
    %712 = vmatprep.subr.bf16.mxu0 0
    %713 = vmatpush1.bf16.msra.mxu0 0
    %714 = vmatprep.subr.bf16.mxu0 0
    %715 = vmatpush1.bf16.msra.mxu0 0
    %716 = vmatprep.subr.bf16.mxu0 0
    %717 = vmatpush1.bf16.msra.mxu0 0
    %718 = vmatprep.subr.bf16.mxu0 0
    %719 = vmatpush1.bf16.msra.mxu0 %v700
    %720 = vmatprep.subr.bf16.mxu0 0
    %721 = vmatpush1.bf16.msra.mxu0 %v699
    %722 = vmatprep.subr.bf16.mxu0 0
    %723 = vmatpush2.bf16.msra.mxu0 0
    %724 = vmatprep.subr.bf16.mxu0 0
    %725 = vmatpush2.bf16.msra.mxu0 0
    %726 = vmatprep.subr.bf16.mxu0 0
    %727 = vmatpush2.bf16.msra.mxu0 0
    %728 = vmatprep.subr.bf16.mxu0 0
    %729 = vmatpush2.bf16.msra.mxu0 0
    %730 = vmatprep.subr.bf16.mxu0 0
    %731 = vmatpush2.bf16.msra.mxu0 0
    %732 = vmatprep.subr.bf16.mxu0 0
    %733 = vmatpush2.bf16.msra.mxu0 0
    %734 = vmatprep.subr.bf16.mxu0 0
    %735 = vmatpush2.bf16.msra.mxu0 0
    %736 = vmatprep.subr.bf16.mxu0 0
    %737 = vmatpush2.bf16.msra.mxu0 0
    %738 = vmatprep.mubr.bf16.mxu0 0
    %739 = vmatmul.mubr.bf16.gmra.mxu0 %v704
    %v740 = vpop.f32.mrf.mxu0
    %v741 = vadd.f32 %v690, %v740
    %v742 = vpop.f32.mrf.mxu0
    %v743 = vpop.f32.mrf.mxu0
    %v744 = vadd.f32 %v690, %v743
    %v745 = vpop.f32.mrf.mxu0
    %746 = vdwg.mxu0
    %v747 = vmax.f32 %v741, 0.0
    %v748 = vmax.f32 %v744, 0.0
    %v749 = vld [vmem:[#allocation4 + $0x38] sm:$0xf]
    %v750 = vld [vmem:[#allocation4 + $0x3c] sm:$0xf]
    %v751 = vld [vmem:[#allocation4 + $0x40] sm:$0xf]
    %v752 = vld [vmem:[#allocation4 + $0x44] sm:$0xf]
    %v753 = vld [vmem:[#allocation4 + $0x48] sm:$0xf]
    %v754 = vld [vmem:[#allocation4 + $0x4c] sm:$0xf]
    %v755 = vld [vmem:[#allocation4 + $0x50] sm:$0xf]
    %v756 = vld [vmem:[#allocation4 + $0x54] sm:$0xf]
    %v757 = vpack.c.bf16 %v748, %v747
    %v758 = vld [vmem:[#allocation6 + $0xa8] sm:$0x1]
    %v759 = vlaneseq
    %v760 = vshrl.u32 %v759, 7
    %v761 = vsub.s32 0, %v760
    %v762 = vrot.slane %v758, %v761
    %v771 = vunpack.c.l.b16 %v749
    %v772 = vunpack.c.l.b16 %v750
    %v773 = vunpack.c.l.b16 %v751
    %v774 = vunpack.c.l.b16 %v752
    %v775 = vunpack.c.l.b16 %v753
    %v776 = vunpack.c.l.b16 %v754
    %v777 = vunpack.c.l.b16 %v755
    %v778 = vunpack.c.l.b16 %v756
    %v779 = vpack.c.b16 %v772, %v771
    %v780 = vpack.c.b16 %v774, %v773
    %v781 = vpack.c.b16 %v776, %v775
    %v782 = vpack.c.b16 %v778, %v777
    %v788 = vsel %vm315, %v757, 0
    %790 = vmatprep.subr.bf16.mxu0 0
    %791 = vmatpush1.bf16.msra.mxu0 0
    %792 = vmatprep.subr.bf16.mxu0 0
    %793 = vmatpush1.bf16.msra.mxu0 0
    %794 = vmatprep.subr.bf16.mxu0 0
    %795 = vmatpush1.bf16.msra.mxu0 0
    %796 = vmatprep.subr.bf16.mxu0 0
    %797 = vmatpush1.bf16.msra.mxu0 0
    %798 = vmatprep.subr.bf16.mxu0 0
    %799 = vmatpush1.bf16.msra.mxu0 %v782
    %800 = vmatprep.subr.bf16.mxu0 0
    %801 = vmatpush1.bf16.msra.mxu0 %v781
    %802 = vmatprep.subr.bf16.mxu0 0
    %803 = vmatpush1.bf16.msra.mxu0 %v780
    %804 = vmatprep.subr.bf16.mxu0 0
    %805 = vmatpush1.bf16.msra.mxu0 %v779
    %806 = vmatprep.subr.bf16.mxu0 0
    %807 = vmatpush2.bf16.msra.mxu0 0
    %808 = vmatprep.subr.bf16.mxu0 0
    %809 = vmatpush2.bf16.msra.mxu0 0
    %810 = vmatprep.subr.bf16.mxu0 0
    %811 = vmatpush2.bf16.msra.mxu0 0
    %812 = vmatprep.subr.bf16.mxu0 0
    %813 = vmatpush2.bf16.msra.mxu0 0
    %814 = vmatprep.subr.bf16.mxu0 0
    %815 = vmatpush2.bf16.msra.mxu0 0
    %816 = vmatprep.subr.bf16.mxu0 0
    %817 = vmatpush2.bf16.msra.mxu0 0
    %818 = vmatprep.subr.bf16.mxu0 0
    %819 = vmatpush2.bf16.msra.mxu0 0
    %820 = vmatprep.subr.bf16.mxu0 0
    %821 = vmatpush2.bf16.msra.mxu0 0
    %822 = vmatprep.mubr.bf16.mxu0 0
    %823 = vmatmul.mubr.bf16.gmra.mxu0 %v788
    %v824 = vpop.f32.mrf.mxu0
    %v825 = vadd.f32 %v762, %v824
    %v826 = vpop.f32.mrf.mxu0
    %v827 = vpop.f32.mrf.mxu0
    %v828 = vadd.f32 %v762, %v827
    %v829 = vpop.f32.mrf.mxu0
    %830 = vdwg.mxu0
    %v831 = vadd.f32 %v679, %v825
    %v832 = vadd.f32 %v680, %v828
    %v833 = vld [vmem:[#allocation6 + $0xb0] sm:$0x1]
    %v834 = vld [vmem:[#allocation6 + $0xb8] sm:$0x1]
    %v835 = vsel %vm144, %v831, 0.0
    %836 = vadd.xlane.f32.xlu0 %v835
    %v837 = vpop.xlane.xlu0 %836
    %v838 = vsel %vm144, %v832, 0.0
    %839 = vadd.xlane.f32.xlu0 %v838
    %v840 = vpop.xlane.xlu0 %839
    %v841 = vmul.f32 %v837, %v648
    %v842 = vmul.f32 %v840, %v648
    %v843 = vsub.f32 %v831, %v841
    %v844 = vsub.f32 %v832, %v842
    %v845 = vmul.f32 %v843, %v843
    %v846 = vmul.f32 %v844, %v844
    %v847 = vsel %vm144, %v845, 0.0
    %848 = vadd.xlane.f32.xlu0 %v847
    %v849 = vpop.xlane.xlu0 %848
    %v850 = vsel %vm144, %v846, 0.0
    %851 = vadd.xlane.f32.xlu0 %v850
    %v852 = vpop.xlane.xlu0 %851
    %v853 = vmul.f32 %v849, %v648
    %v854 = vmul.f32 %v852, %v648
    %v855 = vadd.f32 %v853, 1e-05
    %v856 = vadd.f32 %v854, 1e-05
    %v857 = vrsqrt.pop %v855
    %v858 = vrsqrt.pop %v856
    %v859 = vmul.f32 %v843, %v857
    %v860 = vmul.f32 %v844, %v858
    %v861 = vlaneseq
    %v862 = vshrl.u32 %v861, 7
    %v863 = vsub.s32 0, %v862
    %v864 = vrot.slane %v833, %v863
    %v865 = vmul.f32 %v859, %v864
    %v866 = vmul.f32 %v860, %v864
    %v867 = vlaneseq
    %v868 = vshrl.u32 %v867, 7
    %v869 = vsub.s32 0, %v868
    %v870 = vrot.slane %v834, %v869
    %v871 = vadd.f32 %v865, %v870
    %v872 = vadd.f32 %v866, %v870
    %v873 = vld [vmem:[#allocation4 + $0x58] sm:$0xf]
    %v874 = vld [vmem:[#allocation4 + $0x5c] sm:$0xf]
    %v875 = vld [vmem:[#allocation4 + $0x60] sm:$0xf]
    %v876 = vld [vmem:[#allocation4 + $0x64] sm:$0xf]
    %v877 = vpack.c.bf16 %v872, %v871
    %v878 = vld [vmem:[#allocation6 + $0xc0] sm:$0x1]
    %v879 = vlaneseq
    %v880 = vshrl.u32 %v879, 7
    %v881 = vsub.s32 0, %v880
    %v882 = vrot.slane %v878, %v881
    %v887 = vunpack.c.l.b16 %v873
    %v888 = vunpack.c.l.b16 %v874
    %v889 = vunpack.c.l.b16 %v875
    %v890 = vunpack.c.l.b16 %v876
    %v891 = vpack.c.b16 %v888, %v887
    %v892 = vpack.c.b16 %v890, %v889
    %v896 = vsel %vm144, %v877, 0
    %898 = vmatprep.subr.bf16.mxu0 0
    %899 = vmatpush1.bf16.msra.mxu0 0
    %900 = vmatprep.subr.bf16.mxu0 0
    %901 = vmatpush1.bf16.msra.mxu0 0
    %902 = vmatprep.subr.bf16.mxu0 0
    %903 = vmatpush1.bf16.msra.mxu0 0
    %904 = vmatprep.subr.bf16.mxu0 0
    %905 = vmatpush1.bf16.msra.mxu0 0
    %906 = vmatprep.subr.bf16.mxu0 0
    %907 = vmatpush1.bf16.msra.mxu0 0
    %908 = vmatprep.subr.bf16.mxu0 0
    %909 = vmatpush1.bf16.msra.mxu0 0
    %910 = vmatprep.subr.bf16.mxu0 0
    %911 = vmatpush1.bf16.msra.mxu0 %v892
    %912 = vmatprep.subr.bf16.mxu0 0
    %913 = vmatpush1.bf16.msra.mxu0 %v891
    %914 = vmatprep.subr.bf16.mxu0 0
    %915 = vmatpush2.bf16.msra.mxu0 0
    %916 = vmatprep.subr.bf16.mxu0 0
    %917 = vmatpush2.bf16.msra.mxu0 0
    %918 = vmatprep.subr.bf16.mxu0 0
    %919 = vmatpush2.bf16.msra.mxu0 0
    %920 = vmatprep.subr.bf16.mxu0 0
    %921 = vmatpush2.bf16.msra.mxu0 0
    %922 = vmatprep.subr.bf16.mxu0 0
    %923 = vmatpush2.bf16.msra.mxu0 0
    %924 = vmatprep.subr.bf16.mxu0 0
    %925 = vmatpush2.bf16.msra.mxu0 0
    %926 = vmatprep.subr.bf16.mxu0 0
    %927 = vmatpush2.bf16.msra.mxu0 0
    %928 = vmatprep.subr.bf16.mxu0 0
    %929 = vmatpush2.bf16.msra.mxu0 0
    %930 = vmatprep.mubr.bf16.mxu0 0
    %931 = vmatmul.mubr.bf16.gmra.mxu0 %v896
    %v932 = vpop.f32.mrf.mxu0
    %v933 = vadd.f32 %v882, %v932
    %v934 = vpop.f32.mrf.mxu0
    %v935 = vpop.f32.mrf.mxu0
    %v936 = vadd.f32 %v882, %v935
    %v937 = vpop.f32.mrf.mxu0
    %938 = vdwg.mxu0
    %941 = vrot.lane.b32.xlu0 %v933, 120
    %v942 = vpop.permute.xlu0 %941
    %943 = vrot.lane.b32.xlu0 %v936, 120
    %v944 = vpop.permute.xlu0 %943
    %947 = vrot.lane.b32.xlu0 %v933, 112
    %v948 = vpop.permute.xlu0 %947
    %949 = vrot.lane.b32.xlu0 %v936, 112
    %v950 = vpop.permute.xlu0 %949
    %953 = vrot.lane.b32.xlu0 %v933, 104
    %v954 = vpop.permute.xlu0 %953
    %955 = vrot.lane.b32.xlu0 %v936, 104
    %v956 = vpop.permute.xlu0 %955
    %v959 = vpack.c.bf16 %v936, %v933
    %v960 = vpack.c.bf16 %v944, %v942
    %v961 = vpack.c.bf16 %v950, %v948
    %v962 = vpack.c.bf16 %v956, %v954
    %967 = vrot.lane.b32.xlu0 %v959, 96
    %v968 = vpop.permute.xlu0 %967
    %969 = vrot.lane.b32.xlu0 %v960, 96
    %v970 = vpop.permute.xlu0 %969
    %971 = vrot.lane.b32.xlu0 %v961, 96
    %v972 = vpop.permute.xlu0 %971
    %973 = vrot.lane.b32.xlu0 %v962, 96
    %v974 = vpop.permute.xlu0 %973
    %v976 = vsel %vm225, %v959, 0
    %v979 = vsel %vm225, %v960, 0
    %v982 = vsel %vm225, %v961, 0
    %v985 = vsel %vm225, %v962, 0
    %v988 = vsel %vm225, %v968, 0
    %v991 = vsel %vm225, %v970, 0
    %v994 = vsel %vm225, %v972, 0
    %v997 = vsel %vm225, %v974, 0
    %999 = vmatprep.subr.bf16.mxu0 0
    %1000 = vmatpush1.bf16.xpose.msra.mxu0 0
    %1001 = vmatprep.subr.bf16.mxu0 0
    %1002 = vmatpush1.bf16.xpose.msra.mxu0 0
    %1003 = vmatprep.subr.bf16.mxu0 0
    %1004 = vmatpush1.bf16.xpose.msra.mxu0 0
    %1005 = vmatprep.subr.bf16.mxu0 0
    %1006 = vmatpush1.bf16.xpose.msra.mxu0 0
    %1007 = vmatprep.subr.bf16.mxu0 0
    %1008 = vmatpush1.bf16.xpose.msra.mxu0 %v997
    %1009 = vmatprep.subr.bf16.mxu0 0
    %1010 = vmatpush1.bf16.xpose.msra.mxu0 %v994
    %1011 = vmatprep.subr.bf16.mxu0 0
    %1012 = vmatpush1.bf16.xpose.msra.mxu0 %v991
    %1013 = vmatprep.subr.bf16.mxu0 0
    %1014 = vmatpush1.bf16.xpose.msra.mxu0 %v988
    %1015 = vmatprep.subr.bf16.mxu0 0
    %1016 = vmatpush2.bf16.xpose.msra.mxu0 0
    %1017 = vmatprep.subr.bf16.mxu0 0
    %1018 = vmatpush2.bf16.xpose.msra.mxu0 0
    %1019 = vmatprep.subr.bf16.mxu0 0
    %1020 = vmatpush2.bf16.xpose.msra.mxu0 0
    %1021 = vmatprep.subr.bf16.mxu0 0
    %1022 = vmatpush2.bf16.xpose.msra.mxu0 0
    %1023 = vmatprep.subr.bf16.mxu0 0
    %1024 = vmatpush2.bf16.xpose.msra.mxu0 0
    %1025 = vmatprep.subr.bf16.mxu0 0
    %1026 = vmatpush2.bf16.xpose.msra.mxu0 0
    %1027 = vmatprep.subr.bf16.mxu0 0
    %1028 = vmatpush2.bf16.xpose.msra.mxu0 0
    %1029 = vmatprep.subr.bf16.mxu0 0
    %1030 = vmatpush2.bf16.xpose.msra.mxu0 0
    %1031 = vmatprep.mubr.bf16.mxu0 0
    %1032 = vmatmul.mubr.bf16.gmra.mxu0 %v976
    %v1033 = vpop.f32.mrf.mxu0
    %v1034 = vadd.f32 %v114, %v1033
    %v1035 = vpop.f32.mrf.mxu0
    %v1036 = vpop.f32.mrf.mxu0
    %v1037 = vadd.f32 %v115, %v1036
    %v1038 = vpop.f32.mrf.mxu0
    %1039 = vmatprep.mubr.bf16.mxu0 0
    %1040 = vmatmul.mubr.bf16.gmra.mxu0 %v979
    %v1041 = vpop.f32.mrf.mxu0
    %v1042 = vadd.f32 %v116, %v1041
    %v1043 = vpop.f32.mrf.mxu0
    %v1044 = vpop.f32.mrf.mxu0
    %v1045 = vadd.f32 %v117, %v1044
    %v1046 = vpop.f32.mrf.mxu0
    %1047 = vmatprep.mubr.bf16.mxu0 0
    %1048 = vmatmul.mubr.bf16.gmra.mxu0 %v982
    %v1049 = vpop.f32.mrf.mxu0
    %v1050 = vadd.f32 %v118, %v1049
    %v1051 = vpop.f32.mrf.mxu0
    %v1052 = vpop.f32.mrf.mxu0
    %v1053 = vadd.f32 %v119, %v1052
    %v1054 = vpop.f32.mrf.mxu0
    %1055 = vmatprep.mubr.bf16.mxu0 0
    %1056 = vmatmul.mubr.bf16.gmra.mxu0 %v985
    %v1057 = vpop.f32.mrf.mxu0
    %v1058 = vadd.f32 %v120, %v1057
    %v1059 = vpop.f32.mrf.mxu0
    %v1060 = vpop.f32.mrf.mxu0
    %v1061 = vadd.f32 %v121, %v1060
    %v1062 = vpop.f32.mrf.mxu0
    %1063 = vdwg.mxu0
    %v1064 = vsel %vm315, %v1034, -inf
    %1065 = vmax.xlane.f32.xlu0 %v1064
    %v1066 = vpop.xlane.xlu0 %1065
    %v1067 = vsel %vm315, %v1037, -inf
    %1068 = vmax.xlane.f32.xlu0 %v1067
    %v1069 = vpop.xlane.xlu0 %1068
    %v1070 = vsel %vm315, %v1042, -inf
    %1071 = vmax.xlane.f32.xlu0 %v1070
    %v1072 = vpop.xlane.xlu0 %1071
    %v1073 = vsel %vm315, %v1045, -inf
    %1074 = vmax.xlane.f32.xlu0 %v1073
    %v1075 = vpop.xlane.xlu0 %1074
    %v1076 = vsel %vm315, %v1050, -inf
    %1077 = vmax.xlane.f32.xlu0 %v1076
    %v1078 = vpop.xlane.xlu0 %1077
    %v1079 = vsel %vm315, %v1053, -inf
    %1080 = vmax.xlane.f32.xlu0 %v1079
    %v1081 = vpop.xlane.xlu0 %1080
    %v1082 = vsel %vm315, %v1058, -inf
    %1083 = vmax.xlane.f32.xlu0 %v1082
    %v1084 = vpop.xlane.xlu0 %1083
    %v1085 = vsel %vm315, %v1061, -inf
    %1086 = vmax.xlane.f32.xlu0 %v1085
    %v1087 = vpop.xlane.xlu0 %1086
    %v1088 = vsub.f32 %v1034, %v1066
    %v1089 = vsub.f32 %v1037, %v1069
    %v1090 = vsub.f32 %v1042, %v1072
    %v1091 = vsub.f32 %v1045, %v1075
    %v1092 = vsub.f32 %v1050, %v1078
    %v1093 = vsub.f32 %v1053, %v1081
    %v1094 = vsub.f32 %v1058, %v1084
    %v1095 = vsub.f32 %v1061, %v1087
    %v1096 = vmul.f32 %v1088, 1.442695
    %v1097 = vpow.pop %v1096
    %v1098 = vmul.f32 %v1089, 1.442695
    %v1099 = vpow.pop %v1098
    %v1100 = vmul.f32 %v1090, 1.442695
    %v1101 = vpow.pop %v1100
    %v1102 = vmul.f32 %v1091, 1.442695
    %v1103 = vpow.pop %v1102
    %v1104 = vmul.f32 %v1092, 1.442695
    %v1105 = vpow.pop %v1104
    %v1106 = vmul.f32 %v1093, 1.442695
    %v1107 = vpow.pop %v1106
    %v1108 = vmul.f32 %v1094, 1.442695
    %v1109 = vpow.pop %v1108
    %v1110 = vmul.f32 %v1095, 1.442695
    %v1111 = vpow.pop %v1110
    %v1112 = vsel %vm315, %v1097, 0.0
    %1113 = vadd.xlane.f32.xlu0 %v1112
    %v1114 = vpop.xlane.xlu0 %1113
    %v1115 = vsel %vm315, %v1099, 0.0
    %1116 = vadd.xlane.f32.xlu0 %v1115
    %v1117 = vpop.xlane.xlu0 %1116
    %v1118 = vsel %vm315, %v1101, 0.0
    %1119 = vadd.xlane.f32.xlu0 %v1118
    %v1120 = vpop.xlane.xlu0 %1119
    %v1121 = vsel %vm315, %v1103, 0.0
    %1122 = vadd.xlane.f32.xlu0 %v1121
    %v1123 = vpop.xlane.xlu0 %1122
    %v1124 = vsel %vm315, %v1105, 0.0
    %1125 = vadd.xlane.f32.xlu0 %v1124
    %v1126 = vpop.xlane.xlu0 %1125
    %v1127 = vsel %vm315, %v1107, 0.0
    %1128 = vadd.xlane.f32.xlu0 %v1127
    %v1129 = vpop.xlane.xlu0 %1128
    %v1130 = vsel %vm315, %v1109, 0.0
    %1131 = vadd.xlane.f32.xlu0 %v1130
    %v1132 = vpop.xlane.xlu0 %1131
    %v1133 = vsel %vm315, %v1111, 0.0
    %1134 = vadd.xlane.f32.xlu0 %v1133
    %v1135 = vpop.xlane.xlu0 %1134
    %v1136 = vrcp.pop %v1114
    %v1137 = vrcp.pop %v1117
    %v1138 = vrcp.pop %v1120
    %v1139 = vrcp.pop %v1123
    %v1140 = vrcp.pop %v1126
    %v1141 = vrcp.pop %v1129
    %v1142 = vrcp.pop %v1132
    %v1143 = vrcp.pop %v1135
    %v1144 = vmul.f32 %v1097, %v1136
    %v1145 = vmul.f32 %v1099, %v1137
    %v1146 = vmul.f32 %v1101, %v1138
    %v1147 = vmul.f32 %v1103, %v1139
    %v1148 = vmul.f32 %v1105, %v1140
    %v1149 = vmul.f32 %v1107, %v1141
    %v1150 = vmul.f32 %v1109, %v1142
    %v1151 = vmul.f32 %v1111, %v1143
    %v1152 = vpack.c.bf16 %v1145, %v1144
    %v1153 = vpack.c.bf16 %v1147, %v1146
    %v1154 = vpack.c.bf16 %v1149, %v1148
    %v1155 = vpack.c.bf16 %v1151, %v1150
    %1156 = vrot.lane.b32.xlu0 %v933, 64
    %v1157 = vpop.permute.xlu0 %1156
    %1158 = vrot.lane.b32.xlu0 %v936, 64
    %v1159 = vpop.permute.xlu0 %1158
    %1160 = vrot.lane.b32.xlu0 %v942, 64
    %v1161 = vpop.permute.xlu0 %1160
    %1162 = vrot.lane.b32.xlu0 %v944, 64
    %v1163 = vpop.permute.xlu0 %1162
    %1164 = vrot.lane.b32.xlu0 %v948, 64
    %v1165 = vpop.permute.xlu0 %1164
    %1166 = vrot.lane.b32.xlu0 %v950, 64
    %v1167 = vpop.permute.xlu0 %1166
    %1168 = vrot.lane.b32.xlu0 %v954, 64
    %v1169 = vpop.permute.xlu0 %1168
    %1170 = vrot.lane.b32.xlu0 %v956, 64
    %v1171 = vpop.permute.xlu0 %1170
    %v1181 = vsel %vm315, %v1152, 0
    %v1184 = vsel %vm315, %v1153, 0
    %v1187 = vsel %vm315, %v1154, 0
    %v1190 = vsel %vm315, %v1155, 0
    %1192 = vmatprep.subr.mxu0 0.0
    %1193 = vmatpush1.msra.mxu0 0.0
    %1194 = vmatprep.subr.mxu0 0.0
    %1195 = vmatpush1.msra.mxu0 0.0
    %1196 = vmatprep.subr.mxu0 0.0
    %1197 = vmatpush1.msra.mxu0 0.0
    %1198 = vmatprep.subr.mxu0 0.0
    %1199 = vmatpush1.msra.mxu0 0.0
    %1200 = vmatprep.subr.mxu0 0.0
    %1201 = vmatpush1.msra.mxu0 0.0
    %1202 = vmatprep.subr.mxu0 0.0
    %1203 = vmatpush1.msra.mxu0 0.0
    %1204 = vmatprep.subr.mxu0 0.0
    %1205 = vmatpush1.msra.mxu0 0.0
    %1206 = vmatprep.subr.mxu0 0.0
    %1207 = vmatpush1.msra.mxu0 0.0
    %1208 = vmatprep.subr.mxu0 0.0
    %1209 = vmatpush1.msra.mxu0 %v1171
    %1210 = vmatprep.subr.mxu0 0.0
    %1211 = vmatpush1.msra.mxu0 %v1169
    %1212 = vmatprep.subr.mxu0 0.0
    %1213 = vmatpush1.msra.mxu0 %v1167
    %1214 = vmatprep.subr.mxu0 0.0
    %1215 = vmatpush1.msra.mxu0 %v1165
    %1216 = vmatprep.subr.mxu0 0.0
    %1217 = vmatpush1.msra.mxu0 %v1163
    %1218 = vmatprep.subr.mxu0 0.0
    %1219 = vmatpush1.msra.mxu0 %v1161
    %1220 = vmatprep.subr.mxu0 0.0
    %1221 = vmatpush1.msra.mxu0 %v1159
    %1222 = vmatprep.subr.mxu0 0.0
    %1223 = vmatpush1.msra.mxu0 %v1157
    %1224 = vmatprep.subr.mxu0 0.0
    %1225 = vmatpush2.msra.mxu0 0.0
    %1226 = vmatprep.subr.mxu0 0.0
    %1227 = vmatpush2.msra.mxu0 0.0
    %1228 = vmatprep.subr.mxu0 0.0
    %1229 = vmatpush2.msra.mxu0 0.0
    %1230 = vmatprep.subr.mxu0 0.0
    %1231 = vmatpush2.msra.mxu0 0.0
    %1232 = vmatprep.subr.mxu0 0.0
    %1233 = vmatpush2.msra.mxu0 0.0
    %1234 = vmatprep.subr.mxu0 0.0
    %1235 = vmatpush2.msra.mxu0 0.0
    %1236 = vmatprep.subr.mxu0 0.0
    %1237 = vmatpush2.msra.mxu0 0.0
    %1238 = vmatprep.subr.mxu0 0.0
    %1239 = vmatpush2.msra.mxu0 0.0
    %1240 = vmatprep.subr.mxu0 0.0
    %1241 = vmatpush2.msra.mxu0 0.0
    %1242 = vmatprep.subr.mxu0 0.0
    %1243 = vmatpush2.msra.mxu0 0.0
    %1244 = vmatprep.subr.mxu0 0.0
    %1245 = vmatpush2.msra.mxu0 0.0
    %1246 = vmatprep.subr.mxu0 0.0
    %1247 = vmatpush2.msra.mxu0 0.0
    %1248 = vmatprep.subr.mxu0 0.0
    %1249 = vmatpush2.msra.mxu0 0.0
    %1250 = vmatprep.subr.mxu0 0.0
    %1251 = vmatpush2.msra.mxu0 0.0
    %1252 = vmatprep.subr.mxu0 0.0
    %1253 = vmatpush2.msra.mxu0 0.0
    %1254 = vmatprep.subr.mxu0 0.0
    %1255 = vmatpush2.msra.mxu0 0.0
    %1256 = vmatprep.mubr.bf16.mxu0 0
    %1257 = vmatmul.mubr.bf16.gmra.mxu0 %v1181
    %v1258 = vpop.f32.mrf.mxu0
    %v1259 = vadd.f32 0.0, %v1258
    %v1260 = vpop.f32.mrf.mxu0
    %v1261 = vpop.f32.mrf.mxu0
    %v1262 = vadd.f32 0.0, %v1261
    %v1263 = vpop.f32.mrf.mxu0
    %1264 = vmatprep.mubr.bf16.mxu0 0
    %1265 = vmatmul.mubr.bf16.gmra.mxu0 %v1184
    %v1266 = vpop.f32.mrf.mxu0
    %v1267 = vadd.f32 0.0, %v1266
    %v1268 = vpop.f32.mrf.mxu0
    %v1269 = vpop.f32.mrf.mxu0
    %v1270 = vadd.f32 0.0, %v1269
    %v1271 = vpop.f32.mrf.mxu0
    %1272 = vmatprep.mubr.bf16.mxu0 0
    %1273 = vmatmul.mubr.bf16.gmra.mxu0 %v1187
    %v1274 = vpop.f32.mrf.mxu0
    %v1275 = vadd.f32 0.0, %v1274
    %v1276 = vpop.f32.mrf.mxu0
    %v1277 = vpop.f32.mrf.mxu0
    %v1278 = vadd.f32 0.0, %v1277
    %v1279 = vpop.f32.mrf.mxu0
    %1280 = vmatprep.mubr.bf16.mxu0 0
    %1281 = vmatmul.mubr.bf16.gmra.mxu0 %v1190
    %v1282 = vpop.f32.mrf.mxu0
    %v1283 = vadd.f32 0.0, %v1282
    %v1284 = vpop.f32.mrf.mxu0
    %v1285 = vpop.f32.mrf.mxu0
    %v1286 = vadd.f32 0.0, %v1285
    %v1287 = vpop.f32.mrf.mxu0
    %1288 = vdwg.mxu0
    %1291 = vrot.lane.b32.xlu0 %v1267, 8
    %v1292 = vpop.permute.xlu0 %1291
    %1293 = vrot.lane.b32.xlu0 %v1270, 8
    %v1294 = vpop.permute.xlu0 %1293
    %1299 = vrot.lane.b32.xlu0 %v1275, 16
    %v1300 = vpop.permute.xlu0 %1299
    %1301 = vrot.lane.b32.xlu0 %v1278, 16
    %v1302 = vpop.permute.xlu0 %1301
    %1307 = vrot.lane.b32.xlu0 %v1283, 24
    %v1308 = vpop.permute.xlu0 %1307
    %1309 = vrot.lane.b32.xlu0 %v1286, 24
    %v1310 = vpop.permute.xlu0 %1309
    %v1313 = vsel %vm225, %v1259, %v1292
    %v1314 = vsel %vm225, %v1262, %v1294
    %v1315 = vsel %vm69, %v1313, %v1300
    %v1316 = vsel %vm69, %v1314, %v1302
    %v1317 = vsel %vm569, %v1315, %v1308
    %v1318 = vsel %vm569, %v1316, %v1310
    %v1319 = vld [vmem:[#allocation4 + $0x68] sm:$0xf]
    %v1320 = vld [vmem:[#allocation4 + $0x6c] sm:$0xf]
    %v1321 = vld [vmem:[#allocation4 + $0x70] sm:$0xf]
    %v1322 = vld [vmem:[#allocation4 + $0x74] sm:$0xf]
    %v1323 = vpack.c.bf16 %v1318, %v1317
    %v1324 = vld [vmem:[#allocation6 + $0xc8] sm:$0x1]
    %v1325 = vlaneseq
    %v1326 = vshrl.u32 %v1325, 7
    %v1327 = vsub.s32 0, %v1326
    %v1328 = vrot.slane %v1324, %v1327
    %v1333 = vunpack.c.l.b16 %v1319
    %v1334 = vunpack.c.l.b16 %v1320
    %v1335 = vunpack.c.l.b16 %v1321
    %v1336 = vunpack.c.l.b16 %v1322
    %v1337 = vpack.c.b16 %v1334, %v1333
    %v1338 = vpack.c.b16 %v1336, %v1335
    %v1342 = vsel %vm144, %v1323, 0
    %1344 = vmatprep.subr.bf16.mxu0 0
    %1345 = vmatpush1.bf16.msra.mxu0 0
    %1346 = vmatprep.subr.bf16.mxu0 0
    %1347 = vmatpush1.bf16.msra.mxu0 0
    %1348 = vmatprep.subr.bf16.mxu0 0
    %1349 = vmatpush1.bf16.msra.mxu0 0
    %1350 = vmatprep.subr.bf16.mxu0 0
    %1351 = vmatpush1.bf16.msra.mxu0 0
    %1352 = vmatprep.subr.bf16.mxu0 0
    %1353 = vmatpush1.bf16.msra.mxu0 0
    %1354 = vmatprep.subr.bf16.mxu0 0
    %1355 = vmatpush1.bf16.msra.mxu0 0
    %1356 = vmatprep.subr.bf16.mxu0 0
    %1357 = vmatpush1.bf16.msra.mxu0 %v1338
    %1358 = vmatprep.subr.bf16.mxu0 0
    %1359 = vmatpush1.bf16.msra.mxu0 %v1337
    %1360 = vmatprep.subr.bf16.mxu0 0
    %1361 = vmatpush2.bf16.msra.mxu0 0
    %1362 = vmatprep.subr.bf16.mxu0 0
    %1363 = vmatpush2.bf16.msra.mxu0 0
    %1364 = vmatprep.subr.bf16.mxu0 0
    %1365 = vmatpush2.bf16.msra.mxu0 0
    %1366 = vmatprep.subr.bf16.mxu0 0
    %1367 = vmatpush2.bf16.msra.mxu0 0
    %1368 = vmatprep.subr.bf16.mxu0 0
    %1369 = vmatpush2.bf16.msra.mxu0 0
    %1370 = vmatprep.subr.bf16.mxu0 0
    %1371 = vmatpush2.bf16.msra.mxu0 0
    %1372 = vmatprep.subr.bf16.mxu0 0
    %1373 = vmatpush2.bf16.msra.mxu0 0
    %1374 = vmatprep.subr.bf16.mxu0 0
    %1375 = vmatpush2.bf16.msra.mxu0 0
    %1376 = vmatprep.mubr.bf16.mxu0 0
    %1377 = vmatmul.mubr.bf16.gmra.mxu0 %v1342
    %v1378 = vpop.f32.mrf.mxu0
    %v1379 = vadd.f32 %v1328, %v1378
    %v1380 = vpop.f32.mrf.mxu0
    %v1381 = vpop.f32.mrf.mxu0
    %v1382 = vadd.f32 %v1328, %v1381
    %v1383 = vpop.f32.mrf.mxu0
    %1384 = vdwg.mxu0
    %v1385 = vadd.f32 %v871, %v1379
    %v1386 = vadd.f32 %v872, %v1382
    %v1387 = vld [vmem:[#allocation6 + $0xd0] sm:$0x1]
    %v1388 = vld [vmem:[#allocation6 + $0xd8] sm:$0x1]
    %v1389 = vsel %vm144, %v1385, 0.0
    %1390 = vadd.xlane.f32.xlu0 %v1389
    %v1391 = vpop.xlane.xlu0 %1390
    %v1392 = vsel %vm144, %v1386, 0.0
    %1393 = vadd.xlane.f32.xlu0 %v1392
    %v1394 = vpop.xlane.xlu0 %1393
    %v1395 = vmul.f32 %v1391, %v648
    %v1396 = vmul.f32 %v1394, %v648
    %v1397 = vsub.f32 %v1385, %v1395
    %v1398 = vsub.f32 %v1386, %v1396
    %v1399 = vmul.f32 %v1397, %v1397
    %v1400 = vmul.f32 %v1398, %v1398
    %v1401 = vsel %vm144, %v1399, 0.0
    %1402 = vadd.xlane.f32.xlu0 %v1401
    %v1403 = vpop.xlane.xlu0 %1402
    %v1404 = vsel %vm144, %v1400, 0.0
    %1405 = vadd.xlane.f32.xlu0 %v1404
    %v1406 = vpop.xlane.xlu0 %1405
    %v1407 = vmul.f32 %v1403, %v648
    %v1408 = vmul.f32 %v1406, %v648
    %v1409 = vadd.f32 %v1407, 1e-05
    %v1410 = vadd.f32 %v1408, 1e-05
    %v1411 = vrsqrt.pop %v1409
    %v1412 = vrsqrt.pop %v1410
    %v1413 = vmul.f32 %v1397, %v1411
    %v1414 = vmul.f32 %v1398, %v1412
    %v1415 = vlaneseq
    %v1416 = vshrl.u32 %v1415, 7
    %v1417 = vsub.s32 0, %v1416
    %v1418 = vrot.slane %v1387, %v1417
    %v1419 = vmul.f32 %v1413, %v1418
    %v1420 = vmul.f32 %v1414, %v1418
    %v1421 = vlaneseq
    %v1422 = vshrl.u32 %v1421, 7
    %v1423 = vsub.s32 0, %v1422
    %v1424 = vrot.slane %v1388, %v1423
    %v1425 = vadd.f32 %v1419, %v1424
    %v1426 = vadd.f32 %v1420, %v1424
    %v1427 = vld [vmem:[#allocation4 + $0x78] sm:$0xf]
    %v1428 = vld [vmem:[#allocation4 + $0x7c] sm:$0xf]
    %v1429 = vld [vmem:[#allocation4 + $0x80] sm:$0xf]
    %v1430 = vld [vmem:[#allocation4 + $0x84] sm:$0xf]
    %v1431 = vpack.c.bf16 %v1426, %v1425
    %v1432 = vld [vmem:[#allocation6 + $0xe0] sm:$0x1]
    %v1433 = vlaneseq
    %v1434 = vshrl.u32 %v1433, 7
    %v1435 = vsub.s32 0, %v1434
    %v1436 = vrot.slane %v1432, %v1435
    %v1441 = vunpack.c.l.b16 %v1427
    %v1442 = vunpack.c.l.b16 %v1428
    %v1443 = vunpack.c.l.b16 %v1429
    %v1444 = vunpack.c.l.b16 %v1430
    %v1445 = vpack.c.b16 %v1442, %v1441
    %v1446 = vpack.c.b16 %v1444, %v1443
    %v1450 = vsel %vm144, %v1431, 0
    %1452 = vmatprep.subr.bf16.mxu0 0
    %1453 = vmatpush1.bf16.msra.mxu0 0
    %1454 = vmatprep.subr.bf16.mxu0 0
    %1455 = vmatpush1.bf16.msra.mxu0 0
    %1456 = vmatprep.subr.bf16.mxu0 0
    %1457 = vmatpush1.bf16.msra.mxu0 0
    %1458 = vmatprep.subr.bf16.mxu0 0
    %1459 = vmatpush1.bf16.msra.mxu0 0
    %1460 = vmatprep.subr.bf16.mxu0 0
    %1461 = vmatpush1.bf16.msra.mxu0 0
    %1462 = vmatprep.subr.bf16.mxu0 0
    %1463 = vmatpush1.bf16.msra.mxu0 0
    %1464 = vmatprep.subr.bf16.mxu0 0
    %1465 = vmatpush1.bf16.msra.mxu0 %v1446
    %1466 = vmatprep.subr.bf16.mxu0 0
    %1467 = vmatpush1.bf16.msra.mxu0 %v1445
    %1468 = vmatprep.subr.bf16.mxu0 0
    %1469 = vmatpush2.bf16.msra.mxu0 0
    %1470 = vmatprep.subr.bf16.mxu0 0
    %1471 = vmatpush2.bf16.msra.mxu0 0
    %1472 = vmatprep.subr.bf16.mxu0 0
    %1473 = vmatpush2.bf16.msra.mxu0 0
    %1474 = vmatprep.subr.bf16.mxu0 0
    %1475 = vmatpush2.bf16.msra.mxu0 0
    %1476 = vmatprep.subr.bf16.mxu0 0
    %1477 = vmatpush2.bf16.msra.mxu0 0
    %1478 = vmatprep.subr.bf16.mxu0 0
    %1479 = vmatpush2.bf16.msra.mxu0 0
    %1480 = vmatprep.subr.bf16.mxu0 0
    %1481 = vmatpush2.bf16.msra.mxu0 0
    %1482 = vmatprep.subr.bf16.mxu0 0
    %1483 = vmatpush2.bf16.msra.mxu0 0
    %1484 = vmatprep.mubr.bf16.mxu0 0
    %1485 = vmatmul.mubr.bf16.gmra.mxu0 %v1450
    %v1486 = vpop.f32.mrf.mxu0
    %v1487 = vadd.f32 %v1436, %v1486
    %v1488 = vpop.f32.mrf.mxu0
    %v1489 = vpop.f32.mrf.mxu0
    %v1490 = vadd.f32 %v1436, %v1489
    %v1491 = vpop.f32.mrf.mxu0
    %1492 = vdwg.mxu0
    %v1493 = vmax.f32 %v1487, 0.0
    %v1494 = vmax.f32 %v1490, 0.0
    %v1495 = vld [vmem:[#allocation4 + $0x88] sm:$0xf]
    %v1496 = vld [vmem:[#allocation4 + $0x8c] sm:$0xf]
    %v1497 = vld [vmem:[#allocation4 + $0x90] sm:$0xf]
    %v1498 = vld [vmem:[#allocation4 + $0x94] sm:$0xf]
    %v1499 = vld [vmem:[#allocation4 + $0x98] sm:$0xf]
    %v1500 = vld [vmem:[#allocation4 + $0x9c] sm:$0xf]
    %v1501 = vld [vmem:[#allocation4 + $0xa0] sm:$0xf]
    %v1502 = vld [vmem:[#allocation4 + $0xa4] sm:$0xf]
    %v1503 = vpack.c.bf16 %v1494, %v1493
    %v1504 = vld [vmem:[#allocation6 + $0xe8] sm:$0x1]
    %v1505 = vlaneseq
    %v1506 = vshrl.u32 %v1505, 7
    %v1507 = vsub.s32 0, %v1506
    %v1508 = vrot.slane %v1504, %v1507
    %v1517 = vunpack.c.l.b16 %v1495
    %v1518 = vunpack.c.l.b16 %v1496
    %v1519 = vunpack.c.l.b16 %v1497
    %v1520 = vunpack.c.l.b16 %v1498
    %v1521 = vunpack.c.l.b16 %v1499
    %v1522 = vunpack.c.l.b16 %v1500
    %v1523 = vunpack.c.l.b16 %v1501
    %v1524 = vunpack.c.l.b16 %v1502
    %v1525 = vpack.c.b16 %v1518, %v1517
    %v1526 = vpack.c.b16 %v1520, %v1519
    %v1527 = vpack.c.b16 %v1522, %v1521
    %v1528 = vpack.c.b16 %v1524, %v1523
    %v1534 = vsel %vm315, %v1503, 0
    %1536 = vmatprep.subr.bf16.mxu0 0
    %1537 = vmatpush1.bf16.msra.mxu0 0
    %1538 = vmatprep.subr.bf16.mxu0 0
    %1539 = vmatpush1.bf16.msra.mxu0 0
    %1540 = vmatprep.subr.bf16.mxu0 0
    %1541 = vmatpush1.bf16.msra.mxu0 0
    %1542 = vmatprep.subr.bf16.mxu0 0
    %1543 = vmatpush1.bf16.msra.mxu0 0
    %1544 = vmatprep.subr.bf16.mxu0 0
    %1545 = vmatpush1.bf16.msra.mxu0 %v1528
    %1546 = vmatprep.subr.bf16.mxu0 0
    %1547 = vmatpush1.bf16.msra.mxu0 %v1527
    %1548 = vmatprep.subr.bf16.mxu0 0
    %1549 = vmatpush1.bf16.msra.mxu0 %v1526
    %1550 = vmatprep.subr.bf16.mxu0 0
    %1551 = vmatpush1.bf16.msra.mxu0 %v1525
    %1552 = vmatprep.subr.bf16.mxu0 0
    %1553 = vmatpush2.bf16.msra.mxu0 0
    %1554 = vmatprep.subr.bf16.mxu0 0
    %1555 = vmatpush2.bf16.msra.mxu0 0
    %1556 = vmatprep.subr.bf16.mxu0 0
    %1557 = vmatpush2.bf16.msra.mxu0 0
    %1558 = vmatprep.subr.bf16.mxu0 0
    %1559 = vmatpush2.bf16.msra.mxu0 0
    %1560 = vmatprep.subr.bf16.mxu0 0
    %1561 = vmatpush2.bf16.msra.mxu0 0
    %1562 = vmatprep.subr.bf16.mxu0 0
    %1563 = vmatpush2.bf16.msra.mxu0 0
    %1564 = vmatprep.subr.bf16.mxu0 0
    %1565 = vmatpush2.bf16.msra.mxu0 0
    %1566 = vmatprep.subr.bf16.mxu0 0
    %1567 = vmatpush2.bf16.msra.mxu0 0
    %1568 = vmatprep.mubr.bf16.mxu0 0
    %1569 = vmatmul.mubr.bf16.gmra.mxu0 %v1534
    %v1570 = vpop.f32.mrf.mxu0
    %v1571 = vadd.f32 %v1508, %v1570
    %v1572 = vpop.f32.mrf.mxu0
    %v1573 = vpop.f32.mrf.mxu0
    %v1574 = vadd.f32 %v1508, %v1573
    %v1575 = vpop.f32.mrf.mxu0
    %1576 = vdwg.mxu0
    %v1577 = vadd.f32 %v1425, %v1571
    %v1578 = vadd.f32 %v1426, %v1574
    %v1579 = vld [vmem:[#allocation6 + $0xf0] sm:$0x1]
    %v1580 = vld [vmem:[#allocation6 + $0xf8] sm:$0x1]
    %v1581 = vsel %vm144, %v1577, 0.0
    %1582 = vadd.xlane.f32.xlu0 %v1581
    %v1583 = vpop.xlane.xlu0 %1582
    %v1584 = vsel %vm144, %v1578, 0.0
    %1585 = vadd.xlane.f32.xlu0 %v1584
    %v1586 = vpop.xlane.xlu0 %1585
    %v1587 = vmul.f32 %v1583, %v648
    %v1588 = vmul.f32 %v1586, %v648
    %v1589 = vsub.f32 %v1577, %v1587
    %v1590 = vsub.f32 %v1578, %v1588
    %v1591 = vmul.f32 %v1589, %v1589
    %v1592 = vmul.f32 %v1590, %v1590
    %v1593 = vsel %vm144, %v1591, 0.0
    %1594 = vadd.xlane.f32.xlu0 %v1593
    %v1595 = vpop.xlane.xlu0 %1594
    %v1596 = vsel %vm144, %v1592, 0.0
    %1597 = vadd.xlane.f32.xlu0 %v1596
    %v1598 = vpop.xlane.xlu0 %1597
    %v1599 = vmul.f32 %v1595, %v648
    %v1600 = vmul.f32 %v1598, %v648
    %v1601 = vadd.f32 %v1599, 1e-05
    %v1602 = vadd.f32 %v1600, 1e-05
    %v1603 = vrsqrt.pop %v1601
    %v1604 = vrsqrt.pop %v1602
    %v1605 = vmul.f32 %v1589, %v1603
    %v1606 = vmul.f32 %v1590, %v1604
    %v1607 = vlaneseq
    %v1608 = vshrl.u32 %v1607, 7
    %v1609 = vsub.s32 0, %v1608
    %v1610 = vrot.slane %v1579, %v1609
    %v1611 = vmul.f32 %v1605, %v1610
    %v1612 = vmul.f32 %v1606, %v1610
    %v1613 = vlaneseq
    %v1614 = vshrl.u32 %v1613, 7
    %v1615 = vsub.s32 0, %v1614
    %v1616 = vrot.slane %v1580, %v1615
    %v1617 = vadd.f32 %v1611, %v1616
    %v1618 = vadd.f32 %v1612, %v1616
    %v1619 = vld [vmem:[#allocation6 + $0x50] sm:$0x3]
    %v1621 = vsel %vm69, %v1619, 0
    %1623 = vmatprep.subr.mxu0 0.0
    %1624 = vmatpush1.msra.mxu0 0.0
    %1625 = vmatprep.subr.mxu0 0.0
    %1626 = vmatpush1.msra.mxu0 0.0
    %1627 = vmatprep.subr.mxu0 0.0
    %1628 = vmatpush1.msra.mxu0 0.0
    %1629 = vmatprep.subr.mxu0 0.0
    %1630 = vmatpush1.msra.mxu0 0.0
    %1631 = vmatprep.subr.mxu0 0.0
    %1632 = vmatpush1.msra.mxu0 0.0
    %1633 = vmatprep.subr.mxu0 0.0
    %1634 = vmatpush1.msra.mxu0 0.0
    %1635 = vmatprep.subr.mxu0 0.0
    %1636 = vmatpush1.msra.mxu0 0.0
    %1637 = vmatprep.subr.mxu0 0.0
    %1638 = vmatpush1.msra.mxu0 0.0
    %1639 = vmatprep.subr.mxu0 0.0
    %1640 = vmatpush1.msra.mxu0 0.0
    %1641 = vmatprep.subr.mxu0 0.0
    %1642 = vmatpush1.msra.mxu0 0.0
    %1643 = vmatprep.subr.mxu0 0.0
    %1644 = vmatpush1.msra.mxu0 0.0
    %1645 = vmatprep.subr.mxu0 0.0
    %1646 = vmatpush1.msra.mxu0 0.0
    %1647 = vmatprep.subr.mxu0 0.0
    %1648 = vmatpush1.msra.mxu0 0.0
    %1649 = vmatprep.subr.mxu0 0.0
    %1650 = vmatpush1.msra.mxu0 0.0
    %1651 = vmatprep.subr.mxu0 0.0
    %1652 = vmatpush1.msra.mxu0 %v1618
    %1653 = vmatprep.subr.mxu0 0.0
    %1654 = vmatpush1.msra.mxu0 %v1617
    %1655 = vmatprep.subr.mxu0 0.0
    %1656 = vmatpush2.msra.mxu0 0.0
    %1657 = vmatprep.subr.mxu0 0.0
    %1658 = vmatpush2.msra.mxu0 0.0
    %1659 = vmatprep.subr.mxu0 0.0
    %1660 = vmatpush2.msra.mxu0 0.0
    %1661 = vmatprep.subr.mxu0 0.0
    %1662 = vmatpush2.msra.mxu0 0.0
    %1663 = vmatprep.subr.mxu0 0.0
    %1664 = vmatpush2.msra.mxu0 0.0
    %1665 = vmatprep.subr.mxu0 0.0
    %1666 = vmatpush2.msra.mxu0 0.0
    %1667 = vmatprep.subr.mxu0 0.0
    %1668 = vmatpush2.msra.mxu0 0.0
    %1669 = vmatprep.subr.mxu0 0.0
    %1670 = vmatpush2.msra.mxu0 0.0
    %1671 = vmatprep.subr.mxu0 0.0
    %1672 = vmatpush2.msra.mxu0 0.0
    %1673 = vmatprep.subr.mxu0 0.0
    %1674 = vmatpush2.msra.mxu0 0.0
    %1675 = vmatprep.subr.mxu0 0.0
    %1676 = vmatpush2.msra.mxu0 0.0
    %1677 = vmatprep.subr.mxu0 0.0
    %1678 = vmatpush2.msra.mxu0 0.0
    %1679 = vmatprep.subr.mxu0 0.0
    %1680 = vmatpush2.msra.mxu0 0.0
    %1681 = vmatprep.subr.mxu0 0.0
    %1682 = vmatpush2.msra.mxu0 0.0
    %1683 = vmatprep.subr.mxu0 0.0
    %1684 = vmatpush2.msra.mxu0 0.0
    %1685 = vmatprep.subr.mxu0 0.0
    %1686 = vmatpush2.msra.mxu0 0.0
    %1687 = vmatprep.mubr.f32.mxu0 0.0
    %1688 = vmatmul.mubr.f32.gmra.mxu0 %v1621
    %v1689 = vpop.f32.mrf.mxu0
    %v1690 = vadd.f32 0.0, %v1689
    %v1691 = vpop.f32.mrf.mxu0
    %1692 = vdwg.mxu0
    %v1693 = vld [vmem:[#allocation6 + $0x58] sm:$0xff]
    %v1694 = vld [vmem:[#allocation6 + $0x60] sm:$0xff]
    %v1695 = vld [vmem:[#allocation6 + $0x68] sm:$0xff]
    %v1696 = vld [vmem:[#allocation6 + $0x70] sm:$0xff]
    %v1697 = vld [vmem:[#allocation6 + $0x78] sm:$0x1]
    %v1698 = vlaneseq
    %v1699 = vshrl.u32 %v1698, 7
    %v1700 = vsub.s32 0, %v1699
    %v1701 = vrot.slane %v1697, %v1700
    %v1703 = vsel %vm144, %v1690, 0
    %1705 = vmatprep.subr.mxu0 0.0
    %1706 = vmatpush1.msra.mxu0 0.0
    %1707 = vmatprep.subr.mxu0 0.0
    %1708 = vmatpush1.msra.mxu0 0.0
    %1709 = vmatprep.subr.mxu0 0.0
    %1710 = vmatpush1.msra.mxu0 0.0
    %1711 = vmatprep.subr.mxu0 0.0
    %1712 = vmatpush1.msra.mxu0 0.0
    %1713 = vmatprep.subr.mxu0 0.0
    %1714 = vmatpush1.msra.mxu0 0.0
    %1715 = vmatprep.subr.mxu0 0.0
    %1716 = vmatpush1.msra.mxu0 0.0
    %1717 = vmatprep.subr.mxu0 0.0
    %1718 = vmatpush1.msra.mxu0 0.0
    %1719 = vmatprep.subr.mxu0 0.0
    %1720 = vmatpush1.msra.mxu0 0.0
    %1721 = vmatprep.subr.mxu0 0.0
    %1722 = vmatpush1.msra.mxu0 0.0
    %1723 = vmatprep.subr.mxu0 0.0
    %1724 = vmatpush1.msra.mxu0 0.0
    %1725 = vmatprep.subr.mxu0 0.0
    %1726 = vmatpush1.msra.mxu0 0.0
    %1727 = vmatprep.subr.mxu0 0.0
    %1728 = vmatpush1.msra.mxu0 0.0
    %1729 = vmatprep.subr.mxu0 0.0
    %1730 = vmatpush1.msra.mxu0 %v1696
    %1731 = vmatprep.subr.mxu0 0.0
    %1732 = vmatpush1.msra.mxu0 %v1695
    %1733 = vmatprep.subr.mxu0 0.0
    %1734 = vmatpush1.msra.mxu0 %v1694
    %1735 = vmatprep.subr.mxu0 0.0
    %1736 = vmatpush1.msra.mxu0 %v1693
    %1737 = vmatprep.subr.mxu0 0.0
    %1738 = vmatpush2.msra.mxu0 0.0
    %1739 = vmatprep.subr.mxu0 0.0
    %1740 = vmatpush2.msra.mxu0 0.0
    %1741 = vmatprep.subr.mxu0 0.0
    %1742 = vmatpush2.msra.mxu0 0.0
    %1743 = vmatprep.subr.mxu0 0.0
    %1744 = vmatpush2.msra.mxu0 0.0
    %1745 = vmatprep.subr.mxu0 0.0
    %1746 = vmatpush2.msra.mxu0 0.0
    %1747 = vmatprep.subr.mxu0 0.0
    %1748 = vmatpush2.msra.mxu0 0.0
    %1749 = vmatprep.subr.mxu0 0.0
    %1750 = vmatpush2.msra.mxu0 0.0
    %1751 = vmatprep.subr.mxu0 0.0
    %1752 = vmatpush2.msra.mxu0 0.0
    %1753 = vmatprep.subr.mxu0 0.0
    %1754 = vmatpush2.msra.mxu0 0.0
    %1755 = vmatprep.subr.mxu0 0.0
    %1756 = vmatpush2.msra.mxu0 0.0
    %1757 = vmatprep.subr.mxu0 0.0
    %1758 = vmatpush2.msra.mxu0 0.0
    %1759 = vmatprep.subr.mxu0 0.0
    %1760 = vmatpush2.msra.mxu0 0.0
    %1761 = vmatprep.subr.mxu0 0.0
    %1762 = vmatpush2.msra.mxu0 0.0
    %1763 = vmatprep.subr.mxu0 0.0
    %1764 = vmatpush2.msra.mxu0 0.0
    %1765 = vmatprep.subr.mxu0 0.0
    %1766 = vmatpush2.msra.mxu0 0.0
    %1767 = vmatprep.subr.mxu0 0.0
    %1768 = vmatpush2.msra.mxu0 0.0
    %1769 = vmatprep.mubr.f32.mxu0 0.0
    %1770 = vmatmul.mubr.f32.gmra.mxu0 %v1703
    %v1771 = vpop.f32.mrf.mxu0
    %v1772 = vadd.f32 %v1701, %v1771
    %v1773 = vpop.f32.mrf.mxu0
    %1774 = vdwg.mxu0
    %vm1775 = vcmask 1024
    %1776 = vst.msk [vmem:[%s3] sm:$0x3] %vm1775, %v1772
    // Predicated region
    $region26: #{tpu_custom_call.1} parent=1 // pred_check
      _
    $region27: #{tpu_custom_call.1} parent=1 // pred_check_branch
      %1778 = sbr.rel (0) target = $region29
    $region28: #{tpu_custom_call.1} parent=1 // pred_region
      _
    $region29: #{tpu_custom_call.1} parent=1 // pred_fallthru
      _
    // Predicated region
    $region30: #{tpu_custom_call.1} parent=1 // pred_check
      _
    $region31: #{tpu_custom_call.1} parent=1 // pred_check_branch
      %1780 = sbr.rel (0) target = $region33
    $region32: #{tpu_custom_call.1} parent=1 // pred_region
      _
    $region33: #{tpu_custom_call.1} parent=1 // pred_fallthru
      _
    %1781 = vsyncpa [#allocation3], 1
    %1782 = vsyncpa [#allocation5], 1

</llo_original>
